<compile_context>
chip_gen: v6e
topology: v6e:2x2x1
jax: 0.10.0
libtpu: 0.0.40
codegen_flags: <defaults>
</compile_context>

<pallas_src>
import functools

import jax
import jax.numpy as jnp
import numpy as np
from jax import lax
from jax.experimental import pallas as pl
from jax.experimental.pallas import tpu as pltpu


def _round_up(x, m):
    return ((x + m - 1) // m) * m


def _vmem_capacity_bytes():
    try:
        return int(pltpu.get_tpu_info().vmem_capacity_bytes)
    except Exception:           # not queryable: assume the larger budget
        return 128 << 20


def _compiler_params(dim_sems, approx_block_bytes):
    """CompilerParams with an explicit VMEM limit derived from the block set."""
    limit = int(approx_block_bytes * 1.5) + (8 << 20)
    limit = max(32 << 20, min(limit, 100 << 20))
    return pltpu.CompilerParams(dimension_semantics=dim_sems,
                                vmem_limit_bytes=limit)


# ---------------------------------------------------------------------------
# Stage 1: Sp-chunked key/value reduction (grid = (N, Sp/TS))
# ---------------------------------------------------------------------------
def _stage1_dot_kernel(xa_ref, xm_ref, wk_ref, bk_ref, wv_ref, bv_ref,
                       wq_ref, bq_ref, wqkv_ref, bqkv_ref, kv_acc,
                       *, sp, ts, inv_sp):
    """dot_product: accumulate kv = k^T v over Sp chunks, fold Wq@kv at end."""
    spi = pl.program_id(1)

    @pl.when(spi == 0)
    def _():
        kv_acc[...] = jnp.zeros_like(kv_acc)

    xa = xa_ref[0]                                              # (TS, Cp) bf16
    xm = xm_ref[0]
    k = jnp.dot(xm, wk_ref[...], preferred_element_type=jnp.float32) + bk_ref[...]
    v = jnp.dot(xa, wv_ref[...], preferred_element_type=jnp.float32) + bv_ref[...]
    if sp % ts != 0:
        # zero-padded pooled rows become non-zero after the bias add: mask them.
        row = spi * ts + lax.broadcasted_iota(jnp.int32, (ts, 1), 0)
        k = jnp.where(row < sp, k, 0.0)
    kv_acc[...] += lax.dot_general(
        k.astype(jnp.bfloat16), v.astype(jnp.bfloat16),
        (((0,), (0,)), ((), ())), preferred_element_type=jnp.float32)

    @pl.when(spi == pl.num_programs(1) - 1)
    def _():
        kv = (kv_acc[...] * inv_sp).astype(jnp.bfloat16)        # (ICp, ICp)
        wqkv_ref[0] = jnp.dot(wq_ref[...], kv,
                              preferred_element_type=jnp.float32
                              ).astype(wqkv_ref.dtype)
        bqkv_ref[0] = jnp.dot(bq_ref[...].astype(jnp.bfloat16), kv,
                              preferred_element_type=jnp.float32)


def _stage1_eg_kernel(xa_ref, xm_ref, wk_ref, bk_ref, wv_ref, bv_ref,
                      k_ref, v_ref):
    """embedded_gaussian: emit bf16 K / V chunks (scale folded into Wq/bq)."""
    xa = xa_ref[0]
    xm = xm_ref[0]
    k = jnp.dot(xm, wk_ref[...], preferred_element_type=jnp.float32) + bk_ref[...]
    v = jnp.dot(xa, wv_ref[...], preferred_element_type=jnp.float32) + bv_ref[...]
    k_ref[0] = k.astype(k_ref.dtype)
    v_ref[0] = v.astype(v_ref.dtype)


# ---------------------------------------------------------------------------
# Stage 2: query-tiled attention + output projection + residual (grid=(N,S/TQ))
# ---------------------------------------------------------------------------
def _stage2_dot_kernel(x_ref, wqkv_ref, bqkv_ref, wo_ref, bo_ref, out_ref):
    x = x_ref[0]                                                # (TQ, Cp) f32
    y = jnp.dot(x.astype(jnp.bfloat16), wqkv_ref[0],
                preferred_element_type=jnp.float32) + bqkv_ref[0]
    out = x + (jnp.dot(y.astype(jnp.bfloat16), wo_ref[...],
                       preferred_element_type=jnp.float32) + bo_ref[...])
    out_ref[0] = out.astype(out_ref.dtype)


def _stage2_eg_kernel(x_ref, k_ref, v_ref, wq_ref, bq_ref, wo_ref, bo_ref,
                      out_ref, *, sp, ts):
    x = x_ref[0]                                                # (TQ, Cp) f32
    q = (jnp.dot(x.astype(jnp.bfloat16), wq_ref[...],
                 preferred_element_type=jnp.float32)
         + bq_ref[...]).astype(jnp.bfloat16)                    # (TQ, ICp)
    tq, icp = q.shape
    n_kv = k_ref.shape[1] // ts

    def body(i, carry):
        m_i, l_i, acc = carry
        start = pl.multiple_of(i * ts, ts)
        k_c = k_ref[0, pl.ds(start, ts), :]                     # (TS, ICp) bf16
        v_c = v_ref[0, pl.ds(start, ts), :]
        s = lax.dot_general(q, k_c, (((1,), (1,)), ((), ())),
                            preferred_element_type=jnp.float32)  # (TQ, TS)
        if sp % ts != 0:
            col = start + lax.broadcasted_iota(jnp.int32, (1, ts), 1)
            s = jnp.where(col < sp, s, -1e30)
        m_new = jnp.maximum(m_i, jnp.max(s, axis=-1, keepdims=True))
        alpha = jnp.exp(m_i - m_new)
        p = jnp.exp(s - m_new)
        l_new = alpha * l_i + jnp.sum(p, axis=-1, keepdims=True)
        acc_new = alpha * acc + jnp.dot(p.astype(jnp.bfloat16), v_c,
                                        preferred_element_type=jnp.float32)
        return m_new, l_new, acc_new

    init = (jnp.full((tq, 1), -1e30, jnp.float32),
            jnp.zeros((tq, 1), jnp.float32),
            jnp.zeros((tq, icp), jnp.float32))
    m_i, l_i, acc = lax.fori_loop(0, n_kv, body, init, unroll=n_kv <= 8)
    y = acc / l_i                                               # exact normalize
    out = x + (jnp.dot(y.astype(jnp.bfloat16), wo_ref[...],
                       preferred_element_type=jnp.float32) + bo_ref[...])
    out_ref[0] = out.astype(out_ref.dtype)


# ---------------------------------------------------------------------------
# Wrapper
# ---------------------------------------------------------------------------
def pnb2d_forward(x, params, *, mode="dot_product", use_scale=True,
                  tq=None, ts=None, data_format="NCHW"):
    """PNB2D forward. x: (N,C,H,W) for NCHW (default) or (N,H,W,C) for NHWC."""
    assert mode in ("dot_product", "embedded_gaussian")
    assert data_format in ("NCHW", "NHWC")
    wq, bq, wk, bk, wv, bv, wo, bo = params

    # TODO(synk): for an NCHW producer, reading (1, C, TQ) blocks directly and
    # transposing on the XLU in-kernel would remove these two full-HBM passes;
    # callers that can supply NHWC should use data_format="NHWC" instead.
    if data_format == "NCHW":
        x_nhwc = jnp.transpose(x, (0, 2, 3, 1)).astype(jnp.float32)
    else:
        x_nhwc = x.astype(jnp.float32)
    n, h, w, c = x_nhwc.shape
    ic = wq.shape[1]
    icp = max(128, _round_up(ic, 128))          # lane-dense inter_channels
    cp = max(128, _round_up(c, 128))            # lane-dense channels

    # TODO(synk): 3x3 / stride-2 / pad-1 pooling stays in XLA; strided-window
    # reductions are not expressed inside the Pallas kernels.
    pad = ((0, 0), (1, 1), (1, 1), (0, 0))
    avg = lax.reduce_window(x_nhwc, 0.0, lax.add,
                            (1, 3, 3, 1), (1, 2, 2, 1), pad) / 9.0   # count_include_pad
    mx = lax.reduce_window(x_nhwc, -jnp.inf, lax.max,
                           (1, 3, 3, 1), (1, 2, 2, 1), pad)

    hp, wp = avg.shape[1], avg.shape[2]
    s, sp = h * w, hp * wp

    # Tile sizes derived from the detected VMEM capacity (v7x: 64 MiB).
    small_vmem = _vmem_capacity_bytes() <= (64 << 20)
    if ts is None:
        ts = 256 if small_vmem else 512
    if tq is None:
        if small_vmem:
            tq = 512
        else:
            tq = 1024 if mode == "dot_product" else 512

    ts_eff = _round_up(min(ts, _round_up(sp, 8)), 8)
    sp_pad = _round_up(sp, ts_eff)
    n_sp = sp_pad // ts_eff

    # bf16 pooled activations (stage 1 is memory-bound); channels zero-padded.
    def _prep_kv(t):          # (N, Hp, Wp, C) -> (N, Sp_pad, Cp) bf16
        t = t.reshape(n, sp, c)
        return jnp.pad(t, ((0, 0), (0, sp_pad - sp), (0, cp - c))
                       ).astype(jnp.bfloat16)

    xa_flat = _prep_kv(avg)
    xm_flat = _prep_kv(mx)
    x_flat = jnp.pad(x_nhwc.reshape(n, s, c), ((0, 0), (0, 0), (0, cp - c)))

    # Weights zero-padded to (Cp, ICp)/(ICp, Cp); matmul operands bf16,
    # biases / accumulation f32. embedded_gaussian folds 1/sqrt(IC) into Wq/bq.
    q_scale = (1.0 / float(ic) ** 0.5) if (mode == "embedded_gaussian"
                                           and use_scale) else 1.0

    def pad_in_w(wm, scale=1.0):      # (C, IC) -> (Cp, ICp) bf16
        wm = jnp.asarray(wm, jnp.float32) * scale
        return jnp.pad(wm, ((0, cp - c), (0, icp - ic))).astype(jnp.bfloat16)

    def pad_in_b(bm, scale=1.0):      # (1, IC) -> (1, ICp) f32
        return jnp.pad(jnp.asarray(bm, jnp.float32) * scale,
                       ((0, 0), (0, icp - ic)))

    wq_p, bq_p = pad_in_w(wq, q_scale), pad_in_b(bq, q_scale)
    wk_p, bk_p = pad_in_w(wk), pad_in_b(bk)
    wv_p, bv_p = pad_in_w(wv), pad_in_b(bv)
    wo_p = jnp.pad(jnp.asarray(wo, jnp.float32),
                   ((0, icp - ic), (0, cp - c))).astype(jnp.bfloat16)
    bo_p = jnp.pad(jnp.asarray(bo, jnp.float32), ((0, 0), (0, cp - c)))

    # ---- Stage 1 ------------------------------------------------------------
    kv_chunk_spec = pl.BlockSpec((1, ts_eff, cp), lambda b, i: (b, i, 0))
    w_in_spec = pl.BlockSpec((cp, icp), lambda b, i: (0, 0))
    b_in_spec = pl.BlockSpec((1, icp), lambda b, i: (0, 0))

    s1_block_bytes = (2 * 2 * ts_eff * cp * 2         # xa/xm chunks (2 bufs)
                      + 3 * 2 * cp * icp * 2          # Wk/Wv/Wq
                      + icp * icp * 4                 # kv scratch
                      + 4 * ts_eff * icp * 2          # largest outputs
                      + 2 * cp * icp * 2)

    if mode == "dot_product":
        wqkv, bqkv = pl.pallas_call(
            functools.partial(_stage1_dot_kernel, sp=sp, ts=ts_eff,
                              inv_sp=1.0 / sp),
            out_shape=(jax.ShapeDtypeStruct((n, cp, icp), jnp.bfloat16),
                       jax.ShapeDtypeStruct((n, 1, icp), jnp.float32)),
            grid_spec=pltpu.PrefetchScalarGridSpec(
                num_scalar_prefetch=0, grid=(n, n_sp),
                in_specs=[kv_chunk_spec, kv_chunk_spec,
                          w_in_spec, b_in_spec, w_in_spec, b_in_spec,
                          w_in_spec, b_in_spec],
                out_specs=[pl.BlockSpec((1, cp, icp), lambda b, i: (b, 0, 0)),
                           pl.BlockSpec((1, 1, icp), lambda b, i: (b, 0, 0))],
                scratch_shapes=[pltpu.VMEM((icp, icp), jnp.float32)]),
            compiler_params=_compiler_params(("parallel", "arbitrary"),
                                             s1_block_bytes),
        )(xa_flat, xm_flat, wk_p, bk_p, wv_p, bv_p, wq_p, bq_p)
    else:
        k_s, v_s = pl.pallas_call(
            _stage1_eg_kernel,
            out_shape=(jax.ShapeDtypeStruct((n, sp_pad, icp), jnp.bfloat16),
                       jax.ShapeDtypeStruct((n, sp_pad, icp), jnp.bfloat16)),
            grid_spec=pltpu.PrefetchScalarGridSpec(
                num_scalar_prefetch=0, grid=(n, n_sp),
                in_specs=[kv_chunk_spec, kv_chunk_spec,
                          w_in_spec, b_in_spec, w_in_spec, b_in_spec],
                out_specs=[pl.BlockSpec((1, ts_eff, icp), lambda b, i: (b, i, 0)),
                           pl.BlockSpec((1, ts_eff, icp), lambda b, i: (b, i, 0))]),
            compiler_params=_compiler_params(("parallel", "parallel"),
                                             s1_block_bytes),
        )(xa_flat, xm_flat, wk_p, bk_p, wv_p, bv_p)

    # ---- Stage 2 ------------------------------------------------------------
    tq_eff = _round_up(min(tq, _round_up(s, 8)), 8)
    s_pad = _round_up(s, tq_eff)
    if s_pad != s:
        x_flat = jnp.pad(x_flat, ((0, 0), (0, s_pad - s), (0, 0)))
    n_q = s_pad // tq_eff

    x_spec = pl.BlockSpec((1, tq_eff, cp), lambda b, qi: (b, qi, 0))
    out_spec = pl.BlockSpec((1, tq_eff, cp), lambda b, qi: (b, qi, 0))
    wo_spec = pl.BlockSpec((icp, cp), lambda b, qi: (0, 0))
    bo_spec = pl.BlockSpec((1, cp), lambda b, qi: (0, 0))

    if mode == "dot_product":
        kernel2 = _stage2_dot_kernel
        in_specs = [
            x_spec,
            # per-batch blocks are constant along the inner qi axis: a single
            # buffer is enough, double-buffering them only burns VMEM.
            pl.BlockSpec((1, cp, icp), lambda b, qi: (b, 0, 0),
                         pipeline_mode=pl.Buffered(1)),
            pl.BlockSpec((1, 1, icp), lambda b, qi: (b, 0, 0),
                         pipeline_mode=pl.Buffered(1)),
            wo_spec, bo_spec,
        ]
        operands = (x_flat, wqkv, bqkv, wo_p, bo_p)
        s2_block_bytes = (2 * 2 * tq_eff * cp * 4       # x in + out (f32, 2 bufs)
                          + cp * icp * 2 + 2 * icp * cp * 2)
    else:
        kernel2 = functools.partial(_stage2_eg_kernel, sp=sp, ts=ts_eff)
        in_specs = [
            x_spec,
            pl.BlockSpec((1, sp_pad, icp), lambda b, qi: (b, 0, 0),
                         pipeline_mode=pl.Buffered(1)),
            pl.BlockSpec((1, sp_pad, icp), lambda b, qi: (b, 0, 0),
                         pipeline_mode=pl.Buffered(1)),
            pl.BlockSpec((cp, icp), lambda b, qi: (0, 0)),
            pl.BlockSpec((1, icp), lambda b, qi: (0, 0)),
            wo_spec, bo_spec,
        ]
        operands = (x_flat, k_s, v_s, wq_p, bq_p, wo_p, bo_p)
        s2_block_bytes = (2 * 2 * tq_eff * cp * 4
                          + 2 * sp_pad * icp * 2        # K/V residents (1 buf)
                          + 2 * (cp * icp + icp * cp) * 2
                          + 2 * tq_eff * icp * 4)       # online-softmax state

    out_flat = pl.pallas_call(
        kernel2,
        out_shape=jax.ShapeDtypeStruct((n, s_pad, cp), jnp.float32),
        grid_spec=pltpu.PrefetchScalarGridSpec(
            num_scalar_prefetch=0, grid=(n, n_q),
            in_specs=in_specs, out_specs=out_spec),
        compiler_params=_compiler_params(("parallel", "parallel"),
                                         s2_block_bytes),
    )(*operands)

    out = out_flat[:, :s, :c].reshape(n, h, w, c)
    if data_format == "NCHW":
        out = out.transpose(0, 3, 1, 2)
    return out


# ---------------------------------------------------------------------------
# Pure-JAX reference (validation)
# ---------------------------------------------------------------------------
def pnb2d_ref(x_nchw, params, *, mode="dot_product", use_scale=True):
    wq, bq, wk, bk, wv, bv, wo, bo = params
    n, c, h, w = x_nchw.shape
    x = jnp.transpose(x_nchw, (0, 2, 3, 1)).astype(jnp.float32)
    pad = ((0, 0), (1, 1), (1, 1), (0, 0))
    avg = lax.reduce_window(x, 0.0, lax.add, (1, 3, 3, 1), (1, 2, 2, 1), pad) / 9.0
    mx = lax.reduce_window(x, -jnp.inf, lax.max, (1, 3, 3, 1), (1, 2, 2, 1), pad)
    S, Sp = h * w, avg.shape[1] * avg.shape[2]
    xf = x.reshape(n, S, c)
    xa = avg.reshape(n, Sp, c)
    xm = mx.reshape(n, Sp, c)
    q = xf @ wq + bq
    k = xm @ wk + bk
    v = xa @ wv + bv
    pw = jnp.einsum("nsi,nti->nst", q, k)
    if mode == "dot_product":
        pw = pw / pw.shape[-1]
    else:
        if use_scale:
            pw = pw / (q.shape[-1] ** 0.5)
        pw = jax.nn.softmax(pw, axis=-1)
    y = jnp.einsum("nst,nti->nsi", pw, v)
    out = xf + y @ wo + bo
    return out.reshape(n, h, w, c).transpose(0, 3, 1, 2)


if __name__ == "__main__":
    key = jax.random.PRNGKey(0)

    def make_params(k, c, ic, std=0.01):   # normal_init(std=0.01) as in PNB2D
        ks = jax.random.split(k, 8)
        wq = std * jax.random.normal(ks[0], (c, ic), jnp.float32)
        bq = std * jax.random.normal(ks[1], (1, ic), jnp.float32)
        wk = std * jax.random.normal(ks[2], (c, ic), jnp.float32)
        bk = std * jax.random.normal(ks[3], (1, ic), jnp.float32)
        wv = std * jax.random.normal(ks[4], (c, ic), jnp.float32)
        bv = std * jax.random.normal(ks[5], (1, ic), jnp.float32)
        # conv_out uses the init_weights(zeros_init=False) branch so the
        # attention path actually contributes to the checked output.
        wo = std * jax.random.normal(ks[6], (ic, c), jnp.float32)
        bo = std * jax.random.normal(ks[7], (1, c), jnp.float32)
        return (wq, bq, wk, bk, wv, bv, wo, bo)

    reduction = 4
    configs = [
        (2, 16, 16, 16),   # aligned spatial dims
        (2, 16, 10, 10),   # uneven dims: exercises S/Sp padding + masking
    ]
    for (n, c, h, w) in configs:
        kx, kp, key = jax.random.split(key, 3)
        x = jax.random.normal(kx, (n, c, h, w), jnp.float32)
        params = make_params(kp, c, c // reduction)
        for mode in ("dot_product", "embedded_gaussian"):
            out = jax.block_until_ready(
                pnb2d_forward(x, params, mode=mode, use_scale=True))
            ref = pnb2d_ref(x, params, mode=mode, use_scale=True)
            np.testing.assert_allclose(np.asarray(out), np.asarray(ref),
                                       rtol=1e-3, atol=1e-4)

    print("KERNEL_OK")
</pallas_src>

<mosaic_0001>
module attributes {stable_mosaic.version = 11 : i64} {
  func.func @_stage1_dot_kernel(%arg0: i32, %arg1: i32, %arg2: memref<1x64x128xbf16, #tpu.memory_space<vmem>>, %arg3: memref<1x64x128xbf16, #tpu.memory_space<vmem>>, %arg4: memref<128x128xbf16, #tpu.memory_space<vmem>>, %arg5: memref<1x128xf32, #tpu.memory_space<vmem>>, %arg6: memref<128x128xbf16, #tpu.memory_space<vmem>>, %arg7: memref<1x128xf32, #tpu.memory_space<vmem>>, %arg8: memref<128x128xbf16, #tpu.memory_space<vmem>>, %arg9: memref<1x128xf32, #tpu.memory_space<vmem>>, %arg10: memref<1x128x128xbf16, #tpu.memory_space<vmem>>, %arg11: memref<1x1x128xf32, #tpu.memory_space<vmem>>, %arg12: memref<128x128xf32, #tpu.memory_space<vmem>>) attributes {dimension_semantics = [#tpu.dimension_semantics<parallel>, #tpu.dimension_semantics<arbitrary>], iteration_bounds = array<i64: 2, 1>, scalar_prefetch = 0 : i64, scratch_operands = 1 : i64, tpu.core_type = #tpu.core_type<tc>, window_params = [{transform_indices = @transform_0, window_bounds = array<i64: 1, 64, 128>}, {transform_indices = @transform_1, window_bounds = array<i64: 1, 64, 128>}, {pipeline_mode = #tpu.pipeline_mode<synchronous>, transform_indices = @transform_2, window_bounds = array<i64: 128, 128>}, {pipeline_mode = #tpu.pipeline_mode<synchronous>, transform_indices = @transform_3, window_bounds = array<i64: 1, 128>}, {pipeline_mode = #tpu.pipeline_mode<synchronous>, transform_indices = @transform_4, window_bounds = array<i64: 128, 128>}, {pipeline_mode = #tpu.pipeline_mode<synchronous>, transform_indices = @transform_5, window_bounds = array<i64: 1, 128>}, {pipeline_mode = #tpu.pipeline_mode<synchronous>, transform_indices = @transform_6, window_bounds = array<i64: 128, 128>}, {pipeline_mode = #tpu.pipeline_mode<synchronous>, transform_indices = @transform_7, window_bounds = array<i64: 1, 128>}, {transform_indices = @transform_8, window_bounds = array<i64: 1, 128, 128>}, {transform_indices = @transform_9, window_bounds = array<i64: 1, 1, 128>}]} {
    %c0_i32 = arith.constant 0 : i32
    %0 = arith.cmpi eq, %arg1, %c0_i32 : i32
    %1 = arith.extui %0 : i1 to i32
    %c0_i32_0 = arith.constant 0 : i32
    %2 = arith.cmpi ne, %1, %c0_i32_0 : i32
    scf.if %2 {
      %cst_22 = arith.constant 0.000000e+00 : f32
      %26 = vector.broadcast %cst_22 : f32 to vector<128x128xf32>
      %c0_23 = arith.constant 0 : index
      %c0_24 = arith.constant 0 : index
      %27 = vector.load %arg12[%c0_23, %c0_24] : memref<128x128xf32, #tpu.memory_space<vmem>>, vector<128x128xf32>
      tpu.vector_store %arg12[%c0_23, %c0_24], %26 {strides = array<i32>} : memref<128x128xf32, #tpu.memory_space<vmem>>, vector<128x128xf32>,
    } else {
    }
    %c0 = arith.constant 0 : index
    %c0_1 = arith.constant 0 : index
    %c0_2 = arith.constant 0 : index
    %3 = vector.load %arg2[%c0, %c0_1, %c0_2] : memref<1x64x128xbf16, #tpu.memory_space<vmem>>, vector<1x64x128xbf16>
    %4 = vector.shape_cast %3 : vector<1x64x128xbf16> to vector<64x128xbf16>
    %c0_3 = arith.constant 0 : index
    %c0_4 = arith.constant 0 : index
    %c0_5 = arith.constant 0 : index
    %5 = vector.load %arg3[%c0_3, %c0_4, %c0_5] : memref<1x64x128xbf16, #tpu.memory_space<vmem>>, vector<1x64x128xbf16>
    %6 = vector.shape_cast %5 : vector<1x64x128xbf16> to vector<64x128xbf16>
    %c0_6 = arith.constant 0 : index
    %c0_7 = arith.constant 0 : index
    %7 = vector.load %arg4[%c0_6, %c0_7] : memref<128x128xbf16, #tpu.memory_space<vmem>>, vector<128x128xbf16>
    %cst = arith.constant dense<0.000000e+00> : vector<64x128xf32>
    %8 = tpu.matmul %6, %7, %cst {dimension_numbers = #tpu.dot_dimension_numbers<[1], [0], [0], [1], [0, 0, 1, 1], [], []>} : vector<64x128xbf16>, vector<128x128xbf16>, vector<64x128xf32> -> vector<64x128xf32>
    %c0_8 = arith.constant 0 : index
    %c0_9 = arith.constant 0 : index
    %9 = vector.load %arg5[%c0_8, %c0_9] : memref<1x128xf32, #tpu.memory_space<vmem>>, vector<1x128xf32>
    %10 = vector.broadcast %9 : vector<1x128xf32> to vector<64x128xf32>
    %11 = arith.addf %8, %10 : vector<64x128xf32>
    %c0_10 = arith.constant 0 : index
    %c0_11 = arith.constant 0 : index
    %12 = vector.load %arg6[%c0_10, %c0_11] : memref<128x128xbf16, #tpu.memory_space<vmem>>, vector<128x128xbf16>
    %cst_12 = arith.constant dense<0.000000e+00> : vector<64x128xf32>
    %13 = tpu.matmul %4, %12, %cst_12 {dimension_numbers = #tpu.dot_dimension_numbers<[1], [0], [0], [1], [0, 0, 1, 1], [], []>} : vector<64x128xbf16>, vector<128x128xbf16>, vector<64x128xf32> -> vector<64x128xf32>
    %c0_13 = arith.constant 0 : index
    %c0_14 = arith.constant 0 : index
    %14 = vector.load %arg7[%c0_13, %c0_14] : memref<1x128xf32, #tpu.memory_space<vmem>>, vector<1x128xf32>
    %15 = vector.broadcast %14 : vector<1x128xf32> to vector<64x128xf32>
    %16 = arith.addf %13, %15 : vector<64x128xf32>
    %c0_15 = arith.constant 0 : index
    %c0_16 = arith.constant 0 : index
    %17 = vector.load %arg12[%c0_15, %c0_16] : memref<128x128xf32, #tpu.memory_space<vmem>>, vector<128x128xf32>
    %18 = arith.truncf %11 : vector<64x128xf32> to vector<64x128xbf16>
    %19 = arith.truncf %16 : vector<64x128xf32> to vector<64x128xbf16>
    %cst_17 = arith.constant dense<0.000000e+00> : vector<128x128xf32>
    %20 = tpu.matmul %18, %19, %cst_17 {dimension_numbers = #tpu.dot_dimension_numbers<[0], [0], [1], [1], [0, 1, 1, 1], [], []>} : vector<64x128xbf16>, vector<64x128xbf16>, vector<128x128xf32> -> vector<128x128xf32>
    %21 = arith.addf %17, %20 : vector<128x128xf32>
    %c0_18 = arith.constant 0 : index
    %c0_19 = arith.constant 0 : index
    %22 = vector.load %arg12[%c0_18, %c0_19] : memref<128x128xf32, #tpu.memory_space<vmem>>, vector<128x128xf32>
    tpu.vector_store %arg12[%c0_18, %c0_19], %21 {strides = array<i32>} : memref<128x128xf32, #tpu.memory_space<vmem>>, vector<128x128xf32>,
    %c0_i32_20 = arith.constant 0 : i32
    %23 = arith.cmpi eq, %arg1, %c0_i32_20 : i32
    %24 = arith.extui %23 : i1 to i32
    %c0_i32_21 = arith.constant 0 : i32
    %25 = arith.cmpi ne, %24, %c0_i32_21 : i32
    scf.if %25 {
      %c0_22 = arith.constant 0 : index
      %c0_23 = arith.constant 0 : index
      %26 = vector.load %arg12[%c0_22, %c0_23] : memref<128x128xf32, #tpu.memory_space<vmem>>, vector<128x128xf32>
      %cst_24 = arith.constant 1.562500e-02 : f32
      %27 = vector.broadcast %cst_24 : f32 to vector<128x128xf32>
      %28 = arith.mulf %26, %27 : vector<128x128xf32>
      %29 = arith.truncf %28 : vector<128x128xf32> to vector<128x128xbf16>
      %c0_25 = arith.constant 0 : index
      %c0_26 = arith.constant 0 : index
      %30 = vector.load %arg8[%c0_25, %c0_26] : memref<128x128xbf16, #tpu.memory_space<vmem>>, vector<128x128xbf16>
      %cst_27 = arith.constant dense<0.000000e+00> : vector<128x128xf32>
      %31 = tpu.matmul %30, %29, %cst_27 {dimension_numbers = #tpu.dot_dimension_numbers<[1], [0], [0], [1], [0, 0, 1, 1], [], []>} : vector<128x128xbf16>, vector<128x128xbf16>, vector<128x128xf32> -> vector<128x128xf32>
      %32 = arith.truncf %31 : vector<128x128xf32> to vector<128x128xbf16>
      %c0_28 = arith.constant 0 : index
      %c0_29 = arith.constant 0 : index
      %c0_30 = arith.constant 0 : index
      %33 = vector.load %arg10[%c0_28, %c0_29, %c0_30] : memref<1x128x128xbf16, #tpu.memory_space<vmem>>, vector<1x128x128xbf16>
      %34 = vector.shape_cast %33 : vector<1x128x128xbf16> to vector<128x128xbf16>
      %35 = vector.shape_cast %32 : vector<128x128xbf16> to vector<1x128x128xbf16>
      tpu.vector_store %arg10[%c0_28, %c0_29, %c0_30], %35 {strides = array<i32>} : memref<1x128x128xbf16, #tpu.memory_space<vmem>>, vector<1x128x128xbf16>,
      %c0_31 = arith.constant 0 : index
      %c0_32 = arith.constant 0 : index
      %36 = vector.load %arg9[%c0_31, %c0_32] : memref<1x128xf32, #tpu.memory_space<vmem>>, vector<1x128xf32>
      %37 = arith.truncf %36 : vector<1x128xf32> to vector<1x128xbf16>
      %cst_33 = arith.constant dense<0.000000e+00> : vector<1x128xf32>
      %38 = tpu.matmul %37, %29, %cst_33 {dimension_numbers = #tpu.dot_dimension_numbers<[1], [0], [0], [1], [0, 0, 1, 1], [], []>} : vector<1x128xbf16>, vector<128x128xbf16>, vector<1x128xf32> -> vector<1x128xf32>
      %c0_34 = arith.constant 0 : index
      %c0_35 = arith.constant 0 : index
      %c0_36 = arith.constant 0 : index
      %39 = vector.load %arg11[%c0_34, %c0_35, %c0_36] : memref<1x1x128xf32, #tpu.memory_space<vmem>>, vector<1x1x128xf32>
      %40 = vector.shape_cast %39 : vector<1x1x128xf32> to vector<1x128xf32>
      %41 = vector.shape_cast %38 : vector<1x128xf32> to vector<1x1x128xf32>
      tpu.vector_store %arg11[%c0_34, %c0_35, %c0_36], %41 {strides = array<i32>} : memref<1x1x128xf32, #tpu.memory_space<vmem>>, vector<1x1x128xf32>,
    } else {
    }
    return
  }
  func.func @transform_0(%arg0: i32, %arg1: i32) -> (i32, i32, i32) {
    %c0_i32 = arith.constant 0 : i32
    %c0_i32_0 = arith.constant 0 : i32
    return %arg0, %arg1, %c0_i32 : i32, i32, i32
  }
  func.func @transform_1(%arg0: i32, %arg1: i32) -> (i32, i32, i32) {
    %c0_i32 = arith.constant 0 : i32
    %c0_i32_0 = arith.constant 0 : i32
    return %arg0, %arg1, %c0_i32 : i32, i32, i32
  }
  func.func @transform_2(%arg0: i32, %arg1: i32) -> (i32, i32) {
    %c0_i32 = arith.constant 0 : i32
    %c0_i32_0 = arith.constant 0 : i32
    %c0_i32_1 = arith.constant 0 : i32
    return %c0_i32, %c0_i32_0 : i32, i32
  }
  func.func @transform_3(%arg0: i32, %arg1: i32) -> (i32, i32) {
    %c0_i32 = arith.constant 0 : i32
    %c0_i32_0 = arith.constant 0 : i32
    %c0_i32_1 = arith.constant 0 : i32
    return %c0_i32, %c0_i32_0 : i32, i32
  }
  func.func @transform_4(%arg0: i32, %arg1: i32) -> (i32, i32) {
    %c0_i32 = arith.constant 0 : i32
    %c0_i32_0 = arith.constant 0 : i32
    %c0_i32_1 = arith.constant 0 : i32
    return %c0_i32, %c0_i32_0 : i32, i32
  }
  func.func @transform_5(%arg0: i32, %arg1: i32) -> (i32, i32) {
    %c0_i32 = arith.constant 0 : i32
    %c0_i32_0 = arith.constant 0 : i32
    %c0_i32_1 = arith.constant 0 : i32
    return %c0_i32, %c0_i32_0 : i32, i32
  }
  func.func @transform_6(%arg0: i32, %arg1: i32) -> (i32, i32) {
    %c0_i32 = arith.constant 0 : i32
    %c0_i32_0 = arith.constant 0 : i32
    %c0_i32_1 = arith.constant 0 : i32
    return %c0_i32, %c0_i32_0 : i32, i32
  }
  func.func @transform_7(%arg0: i32, %arg1: i32) -> (i32, i32) {
    %c0_i32 = arith.constant 0 : i32
    %c0_i32_0 = arith.constant 0 : i32
    %c0_i32_1 = arith.constant 0 : i32
    return %c0_i32, %c0_i32_0 : i32, i32
  }
  func.func @transform_8(%arg0: i32, %arg1: i32) -> (i32, i32, i32) {
    %c0_i32 = arith.constant 0 : i32
    %c0_i32_0 = arith.constant 0 : i32
    %c0_i32_1 = arith.constant 0 : i32
    return %arg0, %c0_i32, %c0_i32_0 : i32, i32, i32
  }
  func.func @transform_9(%arg0: i32, %arg1: i32) -> (i32, i32, i32) {
    %c0_i32 = arith.constant 0 : i32
    %c0_i32_0 = arith.constant 0 : i32
    %c0_i32_1 = arith.constant 0 : i32
    return %arg0, %c0_i32, %c0_i32_0 : i32, i32, i32
  }
}

</mosaic_0001>

<llo_original>
// kernel: tpu_custom_call.1
$region0: #{tpu_custom_call.1}
  #allocation0 [shape = 'u32[]', space=smem, size = 0x4, offset = 0x4, fixed_abs, tag = 'smem constant byte address 0x4 - core index']
  #allocation1 [shape = 'u32[144,128]{1,0:T(1,128)}', space=vmem, size = 0x12000, scoped, tag = 'internal scratch']
  #allocation2 [shape = 'f32[128,128]{1,0:T(8,128)}', space=vmem, size = 0x10000, scoped, tag = 'scratch operand']
  %s0 = inlined_call_operand.hbm [shape: bf16[2,64,128], index: 0, kind: input, shape index: {}]
  %s1 = inlined_call_operand.hbm [shape: bf16[2,64,128], index: 1, kind: input, shape index: {}]
  %s2 = inlined_call_operand.hbm [shape: bf16[128,128], index: 2, kind: input, shape index: {}]
  %s3 = inlined_call_operand.vmem [shape: f32[1,128], index: 3, kind: input, shape index: {}]
  %s4 = inlined_call_operand.hbm [shape: bf16[128,128], index: 4, kind: input, shape index: {}]
  %s5 = inlined_call_operand.vmem [shape: f32[1,128], index: 5, kind: input, shape index: {}]
  %s6 = inlined_call_operand.hbm [shape: bf16[128,128], index: 6, kind: input, shape index: {}]
  %s7 = inlined_call_operand.vmem [shape: f32[1,128], index: 7, kind: input, shape index: {}]
  %s8 = inlined_call_operand.hbm [shape: bf16[2,128,128], index: 8, kind: output, shape index: {0}]
  %s9 = inlined_call_operand.hbm [shape: f32[2,1,128], index: 9, kind: output, shape index: {1}]
  %10 = xla_tuple %s8, %s9
  %s11 = sld [smem:[#allocation0]]
  $region101: #{tpu_custom_call.1} parent=0
    _
  %s13 = ssub.s32 1, %s11
  %s14 = scalar_select 0, %s13, %s11
  $region1: #{tpu_custom_call.1} parent=0
    #allocation3 [shape = 'u8[32768]{0}', space=vmem, size = 0x8000, scoped, tag = 'input window, operand 0']
    #allocation4 [shape = 's32[2]{0}', space=sflag, size = 0x8, scoped, tag = 'scoped memory for tpu_custom_call.1']
    #allocation5 [shape = 's32[2]{0}', space=sflag, size = 0x8, scoped, tag = 'scoped memory for tpu_custom_call.1']
    #allocation6 [shape = 'u8[32768]{0}', space=vmem, size = 0x8000, scoped, tag = 'input window, operand 1']
    #allocation7 [shape = 's32[2]{0}', space=sflag, size = 0x8, scoped, tag = 'scoped memory for tpu_custom_call.1']
    #allocation8 [shape = 'u8[32768]{0}', space=vmem, size = 0x8000, scoped, tag = 'input window, operand 2, single buffered']
    #allocation9 [shape = 'u8[32768]{0}', space=vmem, size = 0x8000, scoped, tag = 'input window, operand 4, single buffered']
    #allocation10 [shape = 's32[1]{0}', space=sflag, size = 0x4, scoped, tag = 'scoped memory for tpu_custom_call.1']
    #allocation11 [shape = 'u8[32768]{0}', space=vmem, size = 0x8000, scoped, tag = 'input window, operand 6, single buffered']
    #allocation12 [shape = 'u8[65536]{0}', space=vmem, size = 0x10000, scoped, tag = 'output window, operand 0']
    #allocation13 [shape = 'u8[1024]{0}', space=vmem, size = 0x400, scoped, tag = 'output window, operand 1']
    #allocation14 [shape = 's32[2]{0}', space=sflag, size = 0x8, scoped, tag = 'scoped memory for tpu_custom_call.1']
    %15 = vsyncpa [#allocation4], 0
    %s16 = scalar_lea.sflag [#allocation4], 1
    %17 = vsyncpa %s16, 0
    %18 = vsyncpa [#allocation7], 0
    %s19 = scalar_lea.sflag [#allocation7], 1
    %20 = vsyncpa %s19, 0
    %21 = vsyncpa [#allocation10], 0
    %22 = vsyncpa [#allocation5], 0
    %s23 = scalar_lea.sflag [#allocation5], 1
    %24 = vsyncpa %s23, 0
    %25 = vsyncpa [#allocation14], 0
    %s26 = scalar_lea.sflag [#allocation14], 1
    %27 = vsyncpa %s26, 0
    loop: start=0, step=1, limit=4
    $region2: #{tpu_custom_call.1} parent=1 // loop_pre_header
      _
    $region3: #{tpu_custom_call.1} parent=1 // loop_header
      %s29 = sphi 0, %s33
      %p30 = scmp.ge.s32.totalorder %s29, 4
      %s36 = sphi 0, %s48
      %s37 = sphi 0, %s44
      %s38 = sphi 0, %s36
      %s39 = sphi 0, %s37
      %s40 = sphi 0, %s38
      %s41 = sphi 0, %s39
      %s53 = sphi 0, %s55
      %s56 = sphi 0, %s53
      %s57 = sphi 0, %s56
      %s73 = sphi 0, %s57
      %s81 = sphi 0, %s83
      %s84 = sphi 0, %s81
      %s85 = sphi 0, %s84
      %s101 = sphi 0, %s85
      %s105 = sphi 0, %s105
      %s107 = sphi 0, %s105
      %s108 = sphi 0, %s107
      %s122 = sphi 0, %s108
      %s126 = sphi 0, %s126
      %s128 = sphi 0, %s126
      %s129 = sphi 0, %s128
      %s143 = sphi 0, %s129
      %s147 = sphi 0, %s147
      %s149 = sphi 0, %s147
      %s150 = sphi 0, %s149
      %s164 = sphi 0, %s150
      %s168 = sphi 0, %s168
      %s170 = sphi 0, %s168
      %s171 = sphi 0, %s170
      %s185 = sphi 0, %s171
      %s189 = sphi 0, %s189
      %s191 = sphi 0, %s189
      %s192 = sphi 0, %s191
      %s206 = sphi 0, %s192
      %s210 = sphi 0, %s210
      %s212 = sphi 0, %s210
      %s213 = sphi 0, %s212
      %s227 = sphi 0, %s213
      %s233 = sphi 0, %s235
      %s236 = sphi 0, %s233
      %s237 = sphi 0, %s236
      %s253 = sphi 0, %s237
      %s259 = sphi 0, %s261
      %s262 = sphi 0, %s259
      %s263 = sphi 0, %s262
      %s279 = sphi 0, %s263
    $region4: #{tpu_custom_call.1} parent=1 // loop_header_branch
      %32 = sbr.rel (%p30) target = $region8
    $region5: #{tpu_custom_call.1} parent=1 // loop_body
      %s34 = ssub.s32 %s29, 1
      %s35 = ssub.s32 %s29, 2
      %s42 = sadd.s32 1, %s37
      %p43 = scmp.ge.s32.totalorder %s42, 1
      %s44 = scalar_select %p43, 0, %s42
      %s45 = sadd.s32 1, %s36
      %s46 = scalar_select %p43, %s45, %s36
      %p47 = scmp.ge.s32.totalorder %s46, 2
      %s48 = scalar_select %p47, 0, %s46
      %s49 = ssub.s32 %s36, %s48
      %s50 = ssub.s32 %s37, %s44
      %s51 = sor.u32 %s49, %s50
      %p52 = scmp.eq.s32.totalorder %s51, 0
      %s54 = sadd.s32 %s53, 1
      %s55 = scalar_select %p52, %s53, %s54
      %p58 = pneg %p52
      %p59 = scmp.eq.s32.totalorder %s29, 1
      %p60 = por %p58, %p59
      %p61 = scmp.ne.s32.totalorder %s53, %s56
      %p62 = scmp.eq.s32.totalorder %s29, 0
      %p63 = por %p61, %p62
      %p64 = scmp.ne.s32.totalorder %s53, %s56
      %p65 = scmp.eq.s32.totalorder %s34, 1
      %p66 = por %p64, %p65
      %p67 = scmp.ne.s32.totalorder %s56, %s57
      %p68 = scmp.eq.s32.totalorder %s34, 0
      %p69 = por %p67, %p68
      %p70 = scmp.ne.s32.totalorder %s56, %s57
      %p71 = scmp.eq.s32.totalorder %s35, 1
      %p72 = por %p70, %p71
      %p74 = scmp.ne.s32.totalorder %s57, %s73
      %p75 = scmp.eq.s32.totalorder %s35, 0
      %p76 = por %p74, %p75
      %s77 = ssub.s32 %s36, %s48
      %s78 = ssub.s32 %s37, %s44
      %s79 = sor.u32 %s77, %s78
      %p80 = scmp.eq.s32.totalorder %s79, 0
      %s82 = sadd.s32 %s81, 1
      %s83 = scalar_select %p80, %s81, %s82
      %p86 = pneg %p80
      %p87 = scmp.eq.s32.totalorder %s29, 1
      %p88 = por %p86, %p87
      %p89 = scmp.ne.s32.totalorder %s81, %s84
      %p90 = scmp.eq.s32.totalorder %s29, 0
      %p91 = por %p89, %p90
      %p92 = scmp.ne.s32.totalorder %s81, %s84
      %p93 = scmp.eq.s32.totalorder %s34, 1
      %p94 = por %p92, %p93
      %p95 = scmp.ne.s32.totalorder %s84, %s85
      %p96 = scmp.eq.s32.totalorder %s34, 0
      %p97 = por %p95, %p96
      %p98 = scmp.ne.s32.totalorder %s84, %s85
      %p99 = scmp.eq.s32.totalorder %s35, 1
      %p100 = por %p98, %p99
      %p102 = scmp.ne.s32.totalorder %s85, %s101
      %p103 = scmp.eq.s32.totalorder %s35, 0
      %p104 = por %p102, %p103
      %s106 = sadd.s32 %s105, 1
      %p109 = scmp.eq.s32.totalorder %s29, 1
      %p110 = scmp.ne.s32.totalorder %s105, %s107
      %p111 = scmp.eq.s32.totalorder %s29, 0
      %p112 = por %p110, %p111
      %p113 = scmp.ne.s32.totalorder %s105, %s107
      %p114 = scmp.eq.s32.totalorder %s34, 1
      %p115 = por %p113, %p114
      %p116 = scmp.ne.s32.totalorder %s107, %s108
      %p117 = scmp.eq.s32.totalorder %s34, 0
      %p118 = por %p116, %p117
      %p119 = scmp.ne.s32.totalorder %s107, %s108
      %p120 = scmp.eq.s32.totalorder %s35, 1
      %p121 = por %p119, %p120
      %p123 = scmp.ne.s32.totalorder %s108, %s122
      %p124 = scmp.eq.s32.totalorder %s35, 0
      %p125 = por %p123, %p124
      %s127 = sadd.s32 %s126, 1
      %p130 = scmp.eq.s32.totalorder %s29, 1
      %p131 = scmp.ne.s32.totalorder %s126, %s128
      %p132 = scmp.eq.s32.totalorder %s29, 0
      %p133 = por %p131, %p132
      %p134 = scmp.ne.s32.totalorder %s126, %s128
      %p135 = scmp.eq.s32.totalorder %s34, 1
      %p136 = por %p134, %p135
      %p137 = scmp.ne.s32.totalorder %s128, %s129
      %p138 = scmp.eq.s32.totalorder %s34, 0
      %p139 = por %p137, %p138
      %p140 = scmp.ne.s32.totalorder %s128, %s129
      %p141 = scmp.eq.s32.totalorder %s35, 1
      %p142 = por %p140, %p141
      %p144 = scmp.ne.s32.totalorder %s129, %s143
      %p145 = scmp.eq.s32.totalorder %s35, 0
      %p146 = por %p144, %p145
      %s148 = sadd.s32 %s147, 1
      %p151 = scmp.eq.s32.totalorder %s29, 1
      %p152 = scmp.ne.s32.totalorder %s147, %s149
      %p153 = scmp.eq.s32.totalorder %s29, 0
      %p154 = por %p152, %p153
      %p155 = scmp.ne.s32.totalorder %s147, %s149
      %p156 = scmp.eq.s32.totalorder %s34, 1
      %p157 = por %p155, %p156
      %p158 = scmp.ne.s32.totalorder %s149, %s150
      %p159 = scmp.eq.s32.totalorder %s34, 0
      %p160 = por %p158, %p159
      %p161 = scmp.ne.s32.totalorder %s149, %s150
      %p162 = scmp.eq.s32.totalorder %s35, 1
      %p163 = por %p161, %p162
      %p165 = scmp.ne.s32.totalorder %s150, %s164
      %p166 = scmp.eq.s32.totalorder %s35, 0
      %p167 = por %p165, %p166
      %s169 = sadd.s32 %s168, 1
      %p172 = scmp.eq.s32.totalorder %s29, 1
      %p173 = scmp.ne.s32.totalorder %s168, %s170
      %p174 = scmp.eq.s32.totalorder %s29, 0
      %p175 = por %p173, %p174
      %p176 = scmp.ne.s32.totalorder %s168, %s170
      %p177 = scmp.eq.s32.totalorder %s34, 1
      %p178 = por %p176, %p177
      %p179 = scmp.ne.s32.totalorder %s170, %s171
      %p180 = scmp.eq.s32.totalorder %s34, 0
      %p181 = por %p179, %p180
      %p182 = scmp.ne.s32.totalorder %s170, %s171
      %p183 = scmp.eq.s32.totalorder %s35, 1
      %p184 = por %p182, %p183
      %p186 = scmp.ne.s32.totalorder %s171, %s185
      %p187 = scmp.eq.s32.totalorder %s35, 0
      %p188 = por %p186, %p187
      %s190 = sadd.s32 %s189, 1
      %p193 = scmp.eq.s32.totalorder %s29, 1
      %p194 = scmp.ne.s32.totalorder %s189, %s191
      %p195 = scmp.eq.s32.totalorder %s29, 0
      %p196 = por %p194, %p195
      %p197 = scmp.ne.s32.totalorder %s189, %s191
      %p198 = scmp.eq.s32.totalorder %s34, 1
      %p199 = por %p197, %p198
      %p200 = scmp.ne.s32.totalorder %s191, %s192
      %p201 = scmp.eq.s32.totalorder %s34, 0
      %p202 = por %p200, %p201
      %p203 = scmp.ne.s32.totalorder %s191, %s192
      %p204 = scmp.eq.s32.totalorder %s35, 1
      %p205 = por %p203, %p204
      %p207 = scmp.ne.s32.totalorder %s192, %s206
      %p208 = scmp.eq.s32.totalorder %s35, 0
      %p209 = por %p207, %p208
      %s211 = sadd.s32 %s210, 1
      %p214 = scmp.eq.s32.totalorder %s29, 1
      %p215 = scmp.ne.s32.totalorder %s210, %s212
      %p216 = scmp.eq.s32.totalorder %s29, 0
      %p217 = por %p215, %p216
      %p218 = scmp.ne.s32.totalorder %s210, %s212
      %p219 = scmp.eq.s32.totalorder %s34, 1
      %p220 = por %p218, %p219
      %p221 = scmp.ne.s32.totalorder %s212, %s213
      %p222 = scmp.eq.s32.totalorder %s34, 0
      %p223 = por %p221, %p222
      %p224 = scmp.ne.s32.totalorder %s212, %s213
      %p225 = scmp.eq.s32.totalorder %s35, 1
      %p226 = por %p224, %p225
      %p228 = scmp.ne.s32.totalorder %s213, %s227
      %p229 = scmp.eq.s32.totalorder %s35, 0
      %p230 = por %p228, %p229
      %s231 = ssub.s32 %s36, %s48
      %p232 = scmp.eq.s32.totalorder %s231, 0
      %s234 = sadd.s32 %s233, 1
      %s235 = scalar_select %p232, %s233, %s234
      %p238 = pneg %p232
      %p239 = scmp.eq.s32.totalorder %s29, 1
      %p240 = por %p238, %p239
      %p241 = scmp.ne.s32.totalorder %s233, %s236
      %p242 = scmp.eq.s32.totalorder %s29, 0
      %p243 = por %p241, %p242
      %p244 = scmp.ne.s32.totalorder %s233, %s236
      %p245 = scmp.eq.s32.totalorder %s34, 1
      %p246 = por %p244, %p245
      %p247 = scmp.ne.s32.totalorder %s236, %s237
      %p248 = scmp.eq.s32.totalorder %s34, 0
      %p249 = por %p247, %p248
      %p250 = scmp.ne.s32.totalorder %s236, %s237
      %p251 = scmp.eq.s32.totalorder %s35, 1
      %p252 = por %p250, %p251
      %p254 = scmp.ne.s32.totalorder %s237, %s253
      %p255 = scmp.eq.s32.totalorder %s35, 0
      %p256 = por %p254, %p255
      %s257 = ssub.s32 %s36, %s48
      %p258 = scmp.eq.s32.totalorder %s257, 0
      %s260 = sadd.s32 %s259, 1
      %s261 = scalar_select %p258, %s259, %s260
      %p264 = pneg %p258
      %p265 = scmp.eq.s32.totalorder %s29, 1
      %p266 = por %p264, %p265
      %p267 = scmp.ne.s32.totalorder %s259, %s262
      %p268 = scmp.eq.s32.totalorder %s29, 0
      %p269 = por %p267, %p268
      %p270 = scmp.ne.s32.totalorder %s259, %s262
      %p271 = scmp.eq.s32.totalorder %s34, 1
      %p272 = por %p270, %p271
      %p273 = scmp.ne.s32.totalorder %s262, %s263
      %p274 = scmp.eq.s32.totalorder %s34, 0
      %p275 = por %p273, %p274
      %p276 = scmp.ne.s32.totalorder %s262, %s263
      %p277 = scmp.eq.s32.totalorder %s35, 1
      %p278 = por %p276, %p277
      %p280 = scmp.ne.s32.totalorder %s263, %s279
      %p281 = scmp.eq.s32.totalorder %s35, 0
      %p282 = por %p280, %p281
      %p283 = scmp.le.s32.totalorder 1, %s29
      %p284 = scmp.lt.s32.totalorder %s29, 3
      %p285 = pnand %p283, %p284
      %p286 = pneg %p285
      // Predicated region
      $region9: #{tpu_custom_call.1} parent=5 // pred_check
        _
      $region10: #{tpu_custom_call.1} parent=5 // pred_check_branch
        %288 = sbr.rel (%p285) target = $region12
      $region11: #{tpu_custom_call.1} parent=5 // pred_region
        %s289 = ssub.s32 %s29, 1
        // Predicated region
        $region13: #{tpu_custom_call.1} parent=11 // pred_check
          %p290 = pneg %p118
        $region14: #{tpu_custom_call.1} parent=11 // pred_check_branch
          %292 = sbr.rel (%p290) target = $region16
        $region15: #{tpu_custom_call.1} parent=11 // pred_region
          %s294 = ssub.s32 1024, 1024
          %295 = vsyncadd [#allocation7], %s294
          %s296 = sshll.u32 [#allocation8], 4
          %s297 = int_to_ptr.vmem [resolvable:$true] %s296
          %302 = dma.hbm_to_vmem [thread:$0]  %s2, 1024, %s297, [#allocation7], 64, 64, 4
        $region16: #{tpu_custom_call.1} parent=11 // pred_fallthru
          _
        // Predicated region
        $region17: #{tpu_custom_call.1} parent=11 // pred_check
          %p303 = pneg %p139
        $region18: #{tpu_custom_call.1} parent=11 // pred_check_branch
          %305 = sbr.rel (%p303) target = $region20
        $region19: #{tpu_custom_call.1} parent=11 // pred_region
          _
        $region20: #{tpu_custom_call.1} parent=11 // pred_fallthru
          _
        // Predicated region
        $region21: #{tpu_custom_call.1} parent=11 // pred_check
          %p306 = pneg %p160
        $region22: #{tpu_custom_call.1} parent=11 // pred_check_branch
          %308 = sbr.rel (%p306) target = $region24
        $region23: #{tpu_custom_call.1} parent=11 // pred_region
          %s310 = ssub.s32 1024, 1024
          %311 = vsyncadd [#allocation10], %s310
          %s312 = sshll.u32 [#allocation9], 4
          %s313 = int_to_ptr.vmem [resolvable:$true] %s312
          %318 = dma.hbm_to_vmem [thread:$0]  %s4, 1024, %s313, [#allocation10], 64, 64, 4
        $region24: #{tpu_custom_call.1} parent=11 // pred_fallthru
          _
        // Predicated region
        $region25: #{tpu_custom_call.1} parent=11 // pred_check
          %p319 = pneg %p181
        $region26: #{tpu_custom_call.1} parent=11 // pred_check_branch
          %321 = sbr.rel (%p319) target = $region28
        $region27: #{tpu_custom_call.1} parent=11 // pred_region
          _
        $region28: #{tpu_custom_call.1} parent=11 // pred_fallthru
          _
        // Predicated region
        $region29: #{tpu_custom_call.1} parent=11 // pred_check
          %p322 = pneg %p202
        $region30: #{tpu_custom_call.1} parent=11 // pred_check_branch
          %324 = sbr.rel (%p322) target = $region32
        $region31: #{tpu_custom_call.1} parent=11 // pred_region
          %s326 = ssub.s32 1024, 1024
          %327 = vsyncadd [#allocation10], %s326
          %s328 = sshll.u32 [#allocation11], 4
          %s329 = int_to_ptr.vmem [resolvable:$true] %s328
          %334 = dma.hbm_to_vmem [thread:$0]  %s6, 1024, %s329, [#allocation10], 64, 64, 4
        $region32: #{tpu_custom_call.1} parent=11 // pred_fallthru
          _
        // Predicated region
        $region33: #{tpu_custom_call.1} parent=11 // pred_check
          %p335 = pneg %p223
        $region34: #{tpu_custom_call.1} parent=11 // pred_check_branch
          %337 = sbr.rel (%p335) target = $region36
        $region35: #{tpu_custom_call.1} parent=11 // pred_region
          _
        $region36: #{tpu_custom_call.1} parent=11 // pred_fallthru
          _
      $region12: #{tpu_custom_call.1} parent=5 // pred_fallthru
        _
      %p338 = scmp.lt.s32.totalorder %s29, 2
      // Predicated region
      $region37: #{tpu_custom_call.1} parent=5 // pred_check
        %p339 = pneg %p338
      $region38: #{tpu_custom_call.1} parent=5 // pred_check_branch
        %341 = sbr.rel (%p339) target = $region40
      $region39: #{tpu_custom_call.1} parent=5 // pred_region
        // Predicated region
        $region41: #{tpu_custom_call.1} parent=39 // pred_check
          %p342 = pneg %p63
        $region42: #{tpu_custom_call.1} parent=39 // pred_check_branch
          %344 = sbr.rel (%p342) target = $region44
        $region43: #{tpu_custom_call.1} parent=39 // pred_region
          %s345 = sand.u32 %s53, 1
          %s346 = scalar_lea.sflag [#allocation4], %s345
          %s347 = sand.u32 %s53, 1
          %s348 = smul.addr %s347, 32
          %s349 = scalar_lea.vmem [#allocation3], %s348
          %s350 = smul.u32 8, %s37
          %s352 = ssub.s32 512, 512
          %353 = vsyncadd %s346, %s352
          %s354 = smul.addr %s36, 8
          %s355 = sadd.s32 %s350, %s354
          %s356 = smul.addr %s355, 64
          %s357 = scalar_lea.hbm %s0, %s356
          %s358 = sshll.u32 %s349, 4
          %s359 = int_to_ptr.vmem [resolvable:$true] %s358
          %364 = dma.hbm_to_vmem [thread:$0]  %s357, 512, %s359, %s346, 64, 64, 4
        $region44: #{tpu_custom_call.1} parent=39 // pred_fallthru
          _
        // Predicated region
        $region45: #{tpu_custom_call.1} parent=39 // pred_check
          %p365 = pneg %p91
        $region46: #{tpu_custom_call.1} parent=39 // pred_check_branch
          %367 = sbr.rel (%p365) target = $region48
        $region47: #{tpu_custom_call.1} parent=39 // pred_region
          %s368 = sand.u32 %s29, 1
          %s369 = scalar_lea.sflag [#allocation7], %s368
          %s370 = sand.u32 %s81, 1
          %s371 = smul.addr %s370, 32
          %s372 = scalar_lea.vmem [#allocation6], %s371
          %s373 = smul.u32 8, %s37
          %s375 = ssub.s32 512, 512
          %376 = vsyncadd %s369, %s375
          %s377 = smul.addr %s36, 8
          %s378 = sadd.s32 %s373, %s377
          %s379 = smul.addr %s378, 64
          %s380 = scalar_lea.hbm %s1, %s379
          %s381 = sshll.u32 %s372, 4
          %s382 = int_to_ptr.vmem [resolvable:$true] %s381
          %387 = dma.hbm_to_vmem [thread:$0]  %s380, 512, %s382, %s369, 64, 64, 4
        $region48: #{tpu_custom_call.1} parent=39 // pred_fallthru
          _
      $region40: #{tpu_custom_call.1} parent=5 // pred_fallthru
        _
      %p388 = scmp.le.s32.totalorder 1, %s29
      %p389 = scmp.lt.s32.totalorder %s29, 3
      %p390 = pnand %p388, %p389
      %p391 = pneg %p390
      // Predicated region
      $region49: #{tpu_custom_call.1} parent=5 // pred_check
        _
      $region50: #{tpu_custom_call.1} parent=5 // pred_check_branch
        %393 = sbr.rel (%p390) target = $region52
      $region51: #{tpu_custom_call.1} parent=5 // pred_region
        %s394 = ssub.s32 %s29, 1
        %s395 = sand.u32 %s56, 1
        %s396 = scalar_lea.sflag [#allocation4], %s395
        %s397 = sand.u32 %s56, 1
        %s398 = smul.addr %s397, 32
        %s399 = scalar_lea.vmem [#allocation3], %s398
        // Predicated region
        $region53: #{tpu_custom_call.1} parent=51 // pred_check
          %p400 = pneg %p69
        $region54: #{tpu_custom_call.1} parent=51 // pred_check_branch
          %402 = sbr.rel (%p400) target = $region56
        $region55: #{tpu_custom_call.1} parent=51 // pred_region
          %403 = dma.done %s396, 512
        $region56: #{tpu_custom_call.1} parent=51 // pred_fallthru
          _
        %s404 = sand.u32 %s34, 1
        %s405 = scalar_lea.sflag [#allocation7], %s404
        %s406 = sand.u32 %s84, 1
        %s407 = smul.addr %s406, 32
        %s408 = scalar_lea.vmem [#allocation6], %s407
        // Predicated region
        $region57: #{tpu_custom_call.1} parent=51 // pred_check
          %p409 = pneg %p97
        $region58: #{tpu_custom_call.1} parent=51 // pred_check_branch
          %411 = sbr.rel (%p409) target = $region60
        $region59: #{tpu_custom_call.1} parent=51 // pred_region
          %412 = dma.done %s405, 512
        $region60: #{tpu_custom_call.1} parent=51 // pred_fallthru
          _
        // Predicated region
        $region61: #{tpu_custom_call.1} parent=51 // pred_check
          %p413 = pneg %p118
        $region62: #{tpu_custom_call.1} parent=51 // pred_check_branch
          %415 = sbr.rel (%p413) target = $region64
        $region63: #{tpu_custom_call.1} parent=51 // pred_region
          %416 = dma.done [#allocation7], 1024
        $region64: #{tpu_custom_call.1} parent=51 // pred_fallthru
          _
        // Predicated region
        $region65: #{tpu_custom_call.1} parent=51 // pred_check
          %p417 = pneg %p160
        $region66: #{tpu_custom_call.1} parent=51 // pred_check_branch
          %419 = sbr.rel (%p417) target = $region68
        $region67: #{tpu_custom_call.1} parent=51 // pred_region
          %420 = dma.done [#allocation10], 1024
        $region68: #{tpu_custom_call.1} parent=51 // pred_fallthru
          _
        // Predicated region
        $region69: #{tpu_custom_call.1} parent=51 // pred_check
          %p421 = pneg %p202
        $region70: #{tpu_custom_call.1} parent=51 // pred_check_branch
          %423 = sbr.rel (%p421) target = $region72
        $region71: #{tpu_custom_call.1} parent=51 // pred_region
          %424 = dma.done [#allocation10], 1024
        $region72: #{tpu_custom_call.1} parent=51 // pred_fallthru
          _
        %s425 = sand.u32 %s56, 1
        %s426 = scalar_lea.sflag [#allocation4], %s425
        %s427 = sand.u32 %s56, 1
        %s428 = smul.addr %s427, 32
        %s429 = scalar_lea.vmem [#allocation3], %s428
        %p430 = pneg %p69
        %p431 = pneg %p66
        %s432 = sand.u32 %s34, 1
        %s433 = scalar_lea.sflag [#allocation7], %s432
        %s434 = sand.u32 %s84, 1
        %s435 = smul.addr %s434, 32
        %s436 = scalar_lea.vmem [#allocation6], %s435
        %p437 = pneg %p97
        %p438 = pneg %p94
        %p439 = pneg %p118
        %p440 = pneg %p115
        %p441 = pneg %p139
        %p442 = pneg %p136
        %p443 = pneg %p160
        %p444 = pneg %p157
        %p445 = pneg %p181
        %p446 = pneg %p178
        %p447 = pneg %p202
        %p448 = pneg %p199
        %p449 = pneg %p223
        %p450 = pneg %p220
        %p451 = pneg %p249
        %p452 = pneg %p246
        %s453 = sand.u32 %s236, 1
        %s454 = scalar_lea.sflag [#allocation5], %s453
        %s455 = sand.u32 %s236, 1
        %s456 = smul.addr %s455, 64
        %s457 = scalar_lea.vmem [#allocation12], %s456
        %p458 = pneg %p275
        %p459 = pneg %p272
        %s460 = sand.u32 %s262, 1
        %s461 = scalar_lea.sflag [#allocation14], %s460
        %s462 = sand.u32 %s262, 1
        %s463 = scalar_lea.vmem [#allocation13], %s462
        %s464 = smul.u32 8, %s39
        %s465 = smul.u32 8, %s39
        %p467 = scmp.eq.s32.totalorder %s39, 0
        // Predicated region
        $region73: #{tpu_custom_call.1} parent=51 // pred_check
          %p468 = pneg %p467
        $region74: #{tpu_custom_call.1} parent=51 // pred_check_branch
          %470 = sbr.rel (%p468) target = $region76
        $region75: #{tpu_custom_call.1} parent=51 // pred_region
          %471 = vst [vmem:[#allocation2] sm:$0xff] 0.0
          %472 = vst [vmem:[#allocation2 + $0x8] sm:$0xff] 0.0
          %473 = vst [vmem:[#allocation2 + $0x10] sm:$0xff] 0.0
          %474 = vst [vmem:[#allocation2 + $0x18] sm:$0xff] 0.0
          %475 = vst [vmem:[#allocation2 + $0x20] sm:$0xff] 0.0
          %476 = vst [vmem:[#allocation2 + $0x28] sm:$0xff] 0.0
          %477 = vst [vmem:[#allocation2 + $0x30] sm:$0xff] 0.0
          %478 = vst [vmem:[#allocation2 + $0x38] sm:$0xff] 0.0
          %479 = vst [vmem:[#allocation2 + $0x40] sm:$0xff] 0.0
          %480 = vst [vmem:[#allocation2 + $0x48] sm:$0xff] 0.0
          %481 = vst [vmem:[#allocation2 + $0x50] sm:$0xff] 0.0
          %482 = vst [vmem:[#allocation2 + $0x58] sm:$0xff] 0.0
          %483 = vst [vmem:[#allocation2 + $0x60] sm:$0xff] 0.0
          %484 = vst [vmem:[#allocation2 + $0x68] sm:$0xff] 0.0
          %485 = vst [vmem:[#allocation2 + $0x70] sm:$0xff] 0.0
          %486 = vst [vmem:[#allocation2 + $0x78] sm:$0xff] 0.0
        $region76: #{tpu_custom_call.1} parent=51 // pred_fallthru
          _
        %v487 = vld [vmem:[%s399] sm:$0xf]
        %v488 = vld [vmem:[%s399 + $0x4] sm:$0xf]
        %v489 = vld [vmem:[%s399 + $0x8] sm:$0xf]
        %v490 = vld [vmem:[%s399 + $0xc] sm:$0xf]
        %v491 = vld [vmem:[%s399 + $0x10] sm:$0xf]
        %v492 = vld [vmem:[%s399 + $0x14] sm:$0xf]
        %v493 = vld [vmem:[%s399 + $0x18] sm:$0xf]
        %v494 = vld [vmem:[%s399 + $0x1c] sm:$0xf]
        %v495 = vld [vmem:[%s408] sm:$0xf]
        %v496 = vld [vmem:[%s408 + $0x4] sm:$0xf]
        %v497 = vld [vmem:[%s408 + $0x8] sm:$0xf]
        %v498 = vld [vmem:[%s408 + $0xc] sm:$0xf]
        %v499 = vld [vmem:[%s408 + $0x10] sm:$0xf]
        %v500 = vld [vmem:[%s408 + $0x14] sm:$0xf]
        %v501 = vld [vmem:[%s408 + $0x18] sm:$0xf]
        %v502 = vld [vmem:[%s408 + $0x1c] sm:$0xf]
        %v503 = vld [vmem:[#allocation8] sm:$0xf]
        %v504 = vld [vmem:[#allocation8 + $0x4] sm:$0xf]
        %v505 = vld [vmem:[#allocation8 + $0x8] sm:$0xf]
        %v506 = vld [vmem:[#allocation8 + $0xc] sm:$0xf]
        %v507 = vld [vmem:[#allocation8 + $0x10] sm:$0xf]
        %v508 = vld [vmem:[#allocation8 + $0x14] sm:$0xf]
        %v509 = vld [vmem:[#allocation8 + $0x18] sm:$0xf]
        %v510 = vld [vmem:[#allocation8 + $0x1c] sm:$0xf]
        %v511 = vld [vmem:[#allocation8 + $0x20] sm:$0xf]
        %v512 = vld [vmem:[#allocation8 + $0x24] sm:$0xf]
        %v513 = vld [vmem:[#allocation8 + $0x28] sm:$0xf]
        %v514 = vld [vmem:[#allocation8 + $0x2c] sm:$0xf]
        %v515 = vld [vmem:[#allocation8 + $0x30] sm:$0xf]
        %v516 = vld [vmem:[#allocation8 + $0x34] sm:$0xf]
        %v517 = vld [vmem:[#allocation8 + $0x38] sm:$0xf]
        %v518 = vld [vmem:[#allocation8 + $0x3c] sm:$0xf]
        %v519 = vld [vmem:[%s3] sm:$0x1]
        %v521 = vlaneseq
        %v522 = vshrl.u32 %v521, 7
        %v523 = vsub.s32 0, %v522
        %v524 = vrot.slane %v519, %v523
        %v534 = vunpack.c.l.b16 %v495
        %v535 = vunpack.c.l.b16 %v496
        %v536 = vunpack.c.l.b16 %v497
        %v537 = vunpack.c.l.b16 %v498
        %v538 = vunpack.c.l.b16 %v499
        %v539 = vunpack.c.l.b16 %v500
        %v540 = vunpack.c.l.b16 %v501
        %v541 = vunpack.c.l.b16 %v502
        %v542 = vpack.c.b16 %v535, %v534
        %v543 = vpack.c.b16 %v537, %v536
        %v544 = vpack.c.b16 %v539, %v538
        %v545 = vpack.c.b16 %v541, %v540
        %v566 = vunpack.c.l.b16 %v503
        %v567 = vunpack.c.l.b16 %v504
        %v568 = vunpack.c.l.b16 %v505
        %v569 = vunpack.c.l.b16 %v506
        %v570 = vunpack.c.l.b16 %v507
        %v571 = vunpack.c.l.b16 %v508
        %v572 = vunpack.c.l.b16 %v509
        %v573 = vunpack.c.l.b16 %v510
        %v574 = vunpack.c.l.b16 %v511
        %v575 = vunpack.c.l.b16 %v512
        %v576 = vunpack.c.l.b16 %v513
        %v577 = vunpack.c.l.b16 %v514
        %v578 = vunpack.c.l.b16 %v515
        %v579 = vunpack.c.l.b16 %v516
        %v580 = vunpack.c.l.b16 %v517
        %v581 = vunpack.c.l.b16 %v518
        %v582 = vpack.c.b16 %v567, %v566
        %v583 = vpack.c.b16 %v569, %v568
        %v584 = vpack.c.b16 %v571, %v570
        %v585 = vpack.c.b16 %v573, %v572
        %v586 = vpack.c.b16 %v575, %v574
        %v587 = vpack.c.b16 %v577, %v576
        %v588 = vpack.c.b16 %v579, %v578
        %v589 = vpack.c.b16 %v581, %v580
        %598 = vmatprep.subr.bf16.mxu0 0
        %599 = vmatpush1.bf16.msra.mxu0 %v589
        %600 = vmatprep.subr.bf16.mxu0 0
        %601 = vmatpush1.bf16.msra.mxu0 %v588
        %602 = vmatprep.subr.bf16.mxu0 0
        %603 = vmatpush1.bf16.msra.mxu0 %v587
        %604 = vmatprep.subr.bf16.mxu0 0
        %605 = vmatpush1.bf16.msra.mxu0 %v586
        %606 = vmatprep.subr.bf16.mxu0 0
        %607 = vmatpush1.bf16.msra.mxu0 %v585
        %608 = vmatprep.subr.bf16.mxu0 0
        %609 = vmatpush1.bf16.msra.mxu0 %v584
        %610 = vmatprep.subr.bf16.mxu0 0
        %611 = vmatpush1.bf16.msra.mxu0 %v583
        %612 = vmatprep.subr.bf16.mxu0 0
        %613 = vmatpush1.bf16.msra.mxu0 %v582
        %614 = vmatprep.subr.bf16.mxu0 0
        %615 = vmatpush2.bf16.msra.mxu0 0
        %616 = vmatprep.subr.bf16.mxu0 0
        %617 = vmatpush2.bf16.msra.mxu0 0
        %618 = vmatprep.subr.bf16.mxu0 0
        %619 = vmatpush2.bf16.msra.mxu0 0
        %620 = vmatprep.subr.bf16.mxu0 0
        %621 = vmatpush2.bf16.msra.mxu0 0
        %622 = vmatprep.subr.bf16.mxu0 0
        %623 = vmatpush2.bf16.msra.mxu0 0
        %624 = vmatprep.subr.bf16.mxu0 0
        %625 = vmatpush2.bf16.msra.mxu0 0
        %626 = vmatprep.subr.bf16.mxu0 0
        %627 = vmatpush2.bf16.msra.mxu0 0
        %628 = vmatprep.subr.bf16.mxu0 0
        %629 = vmatpush2.bf16.msra.mxu0 0
        %630 = vmatprep.mubr.bf16.mxu0 0
        %631 = vmatmul.mubr.bf16.gmra.mxu0 %v542
        %v632 = vpop.f32.mrf.mxu0
        %v633 = vadd.f32 %v524, %v632
        %v634 = vpop.f32.mrf.mxu0
        %v635 = vpop.f32.mrf.mxu0
        %v636 = vadd.f32 %v524, %v635
        %v637 = vpop.f32.mrf.mxu0
        %638 = vmatprep.mubr.bf16.mxu0 0
        %639 = vmatmul.mubr.bf16.gmra.mxu0 %v543
        %v640 = vpop.f32.mrf.mxu0
        %v641 = vadd.f32 %v524, %v640
        %v642 = vpop.f32.mrf.mxu0
        %v643 = vpop.f32.mrf.mxu0
        %v644 = vadd.f32 %v524, %v643
        %v645 = vpop.f32.mrf.mxu0
        %646 = vmatprep.mubr.bf16.mxu0 0
        %647 = vmatmul.mubr.bf16.gmra.mxu0 %v544
        %v648 = vpop.f32.mrf.mxu0
        %v649 = vadd.f32 %v524, %v648
        %v650 = vpop.f32.mrf.mxu0
        %v651 = vpop.f32.mrf.mxu0
        %v652 = vadd.f32 %v524, %v651
        %v653 = vpop.f32.mrf.mxu0
        %654 = vmatprep.mubr.bf16.mxu0 0
        %655 = vmatmul.mubr.bf16.gmra.mxu0 %v545
        %v656 = vpop.f32.mrf.mxu0
        %v657 = vadd.f32 %v524, %v656
        %v658 = vpop.f32.mrf.mxu0
        %v659 = vpop.f32.mrf.mxu0
        %v660 = vadd.f32 %v524, %v659
        %v661 = vpop.f32.mrf.mxu0
        %662 = vdwg.mxu0
        %v663 = vld [vmem:[#allocation9] sm:$0xf]
        %v664 = vld [vmem:[#allocation9 + $0x4] sm:$0xf]
        %v665 = vld [vmem:[#allocation9 + $0x8] sm:$0xf]
        %v666 = vld [vmem:[#allocation9 + $0xc] sm:$0xf]
        %v667 = vld [vmem:[#allocation9 + $0x10] sm:$0xf]
        %v668 = vld [vmem:[#allocation9 + $0x14] sm:$0xf]
        %v669 = vld [vmem:[#allocation9 + $0x18] sm:$0xf]
        %v670 = vld [vmem:[#allocation9 + $0x1c] sm:$0xf]
        %v671 = vld [vmem:[#allocation9 + $0x20] sm:$0xf]
        %v672 = vld [vmem:[#allocation9 + $0x24] sm:$0xf]
        %v673 = vld [vmem:[#allocation9 + $0x28] sm:$0xf]
        %v674 = vld [vmem:[#allocation9 + $0x2c] sm:$0xf]
        %v675 = vld [vmem:[#allocation9 + $0x30] sm:$0xf]
        %v676 = vld [vmem:[#allocation9 + $0x34] sm:$0xf]
        %v677 = vld [vmem:[#allocation9 + $0x38] sm:$0xf]
        %v678 = vld [vmem:[#allocation9 + $0x3c] sm:$0xf]
        %v679 = vld [vmem:[%s5] sm:$0x1]
        %v681 = vlaneseq
        %v682 = vshrl.u32 %v681, 7
        %v683 = vsub.s32 0, %v682
        %v684 = vrot.slane %v679, %v683
        %v694 = vunpack.c.l.b16 %v487
        %v695 = vunpack.c.l.b16 %v488
        %v696 = vunpack.c.l.b16 %v489
        %v697 = vunpack.c.l.b16 %v490
        %v698 = vunpack.c.l.b16 %v491
        %v699 = vunpack.c.l.b16 %v492
        %v700 = vunpack.c.l.b16 %v493
        %v701 = vunpack.c.l.b16 %v494
        %v702 = vpack.c.b16 %v695, %v694
        %v703 = vpack.c.b16 %v697, %v696
        %v704 = vpack.c.b16 %v699, %v698
        %v705 = vpack.c.b16 %v701, %v700
        %v726 = vunpack.c.l.b16 %v663
        %v727 = vunpack.c.l.b16 %v664
        %v728 = vunpack.c.l.b16 %v665
        %v729 = vunpack.c.l.b16 %v666
        %v730 = vunpack.c.l.b16 %v667
        %v731 = vunpack.c.l.b16 %v668
        %v732 = vunpack.c.l.b16 %v669
        %v733 = vunpack.c.l.b16 %v670
        %v734 = vunpack.c.l.b16 %v671
        %v735 = vunpack.c.l.b16 %v672
        %v736 = vunpack.c.l.b16 %v673
        %v737 = vunpack.c.l.b16 %v674
        %v738 = vunpack.c.l.b16 %v675
        %v739 = vunpack.c.l.b16 %v676
        %v740 = vunpack.c.l.b16 %v677
        %v741 = vunpack.c.l.b16 %v678
        %v742 = vpack.c.b16 %v727, %v726
        %v743 = vpack.c.b16 %v729, %v728
        %v744 = vpack.c.b16 %v731, %v730
        %v745 = vpack.c.b16 %v733, %v732
        %v746 = vpack.c.b16 %v735, %v734
        %v747 = vpack.c.b16 %v737, %v736
        %v748 = vpack.c.b16 %v739, %v738
        %v749 = vpack.c.b16 %v741, %v740
        %758 = vmatprep.subr.bf16.mxu0 0
        %759 = vmatpush1.bf16.msra.mxu0 %v749
        %760 = vmatprep.subr.bf16.mxu0 0
        %761 = vmatpush1.bf16.msra.mxu0 %v748
        %762 = vmatprep.subr.bf16.mxu0 0
        %763 = vmatpush1.bf16.msra.mxu0 %v747
        %764 = vmatprep.subr.bf16.mxu0 0
        %765 = vmatpush1.bf16.msra.mxu0 %v746
        %766 = vmatprep.subr.bf16.mxu0 0
        %767 = vmatpush1.bf16.msra.mxu0 %v745
        %768 = vmatprep.subr.bf16.mxu0 0
        %769 = vmatpush1.bf16.msra.mxu0 %v744
        %770 = vmatprep.subr.bf16.mxu0 0
        %771 = vmatpush1.bf16.msra.mxu0 %v743
        %772 = vmatprep.subr.bf16.mxu0 0
        %773 = vmatpush1.bf16.msra.mxu0 %v742
        %774 = vmatprep.subr.bf16.mxu0 0
        %775 = vmatpush2.bf16.msra.mxu0 0
        %776 = vmatprep.subr.bf16.mxu0 0
        %777 = vmatpush2.bf16.msra.mxu0 0
        %778 = vmatprep.subr.bf16.mxu0 0
        %779 = vmatpush2.bf16.msra.mxu0 0
        %780 = vmatprep.subr.bf16.mxu0 0
        %781 = vmatpush2.bf16.msra.mxu0 0
        %782 = vmatprep.subr.bf16.mxu0 0
        %783 = vmatpush2.bf16.msra.mxu0 0
        %784 = vmatprep.subr.bf16.mxu0 0
        %785 = vmatpush2.bf16.msra.mxu0 0
        %786 = vmatprep.subr.bf16.mxu0 0
        %787 = vmatpush2.bf16.msra.mxu0 0
        %788 = vmatprep.subr.bf16.mxu0 0
        %789 = vmatpush2.bf16.msra.mxu0 0
        %790 = vmatprep.mubr.bf16.mxu0 0
        %791 = vmatmul.mubr.bf16.gmra.mxu0 %v702
        %v792 = vpop.f32.mrf.mxu0
        %v793 = vadd.f32 %v684, %v792
        %v794 = vpop.f32.mrf.mxu0
        %v795 = vpop.f32.mrf.mxu0
        %v796 = vadd.f32 %v684, %v795
        %v797 = vpop.f32.mrf.mxu0
        %798 = vmatprep.mubr.bf16.mxu0 0
        %799 = vmatmul.mubr.bf16.gmra.mxu0 %v703
        %v800 = vpop.f32.mrf.mxu0
        %v801 = vadd.f32 %v684, %v800
        %v802 = vpop.f32.mrf.mxu0
        %v803 = vpop.f32.mrf.mxu0
        %v804 = vadd.f32 %v684, %v803
        %v805 = vpop.f32.mrf.mxu0
        %806 = vmatprep.mubr.bf16.mxu0 0
        %807 = vmatmul.mubr.bf16.gmra.mxu0 %v704
        %v808 = vpop.f32.mrf.mxu0
        %v809 = vadd.f32 %v684, %v808
        %v810 = vpop.f32.mrf.mxu0
        %v811 = vpop.f32.mrf.mxu0
        %v812 = vadd.f32 %v684, %v811
        %v813 = vpop.f32.mrf.mxu0
        %814 = vmatprep.mubr.bf16.mxu0 0
        %815 = vmatmul.mubr.bf16.gmra.mxu0 %v705
        %v816 = vpop.f32.mrf.mxu0
        %v817 = vadd.f32 %v684, %v816
        %v818 = vpop.f32.mrf.mxu0
        %v819 = vpop.f32.mrf.mxu0
        %v820 = vadd.f32 %v684, %v819
        %v821 = vpop.f32.mrf.mxu0
        %822 = vdwg.mxu0
        %v823 = vld [vmem:[#allocation2] sm:$0xff]
        %v824 = vld [vmem:[#allocation2 + $0x8] sm:$0xff]
        %v825 = vld [vmem:[#allocation2 + $0x10] sm:$0xff]
        %v826 = vld [vmem:[#allocation2 + $0x18] sm:$0xff]
        %v827 = vld [vmem:[#allocation2 + $0x20] sm:$0xff]
        %v828 = vld [vmem:[#allocation2 + $0x28] sm:$0xff]
        %v829 = vld [vmem:[#allocation2 + $0x30] sm:$0xff]
        %v830 = vld [vmem:[#allocation2 + $0x38] sm:$0xff]
        %v831 = vld [vmem:[#allocation2 + $0x40] sm:$0xff]
        %v832 = vld [vmem:[#allocation2 + $0x48] sm:$0xff]
        %v833 = vld [vmem:[#allocation2 + $0x50] sm:$0xff]
        %v834 = vld [vmem:[#allocation2 + $0x58] sm:$0xff]
        %v835 = vld [vmem:[#allocation2 + $0x60] sm:$0xff]
        %v836 = vld [vmem:[#allocation2 + $0x68] sm:$0xff]
        %v837 = vld [vmem:[#allocation2 + $0x70] sm:$0xff]
        %v838 = vld [vmem:[#allocation2 + $0x78] sm:$0xff]
        %v839 = vpack.c.bf16 %v636, %v633
        %v840 = vpack.c.bf16 %v644, %v641
        %v841 = vpack.c.bf16 %v652, %v649
        %v842 = vpack.c.bf16 %v660, %v657
        %v843 = vpack.c.bf16 %v796, %v793
        %v844 = vpack.c.bf16 %v804, %v801
        %v845 = vpack.c.bf16 %v812, %v809
        %v846 = vpack.c.bf16 %v820, %v817
        %847 = vxpose.xlu0.c.b16.start [1/8] %v839, 128
        %848 = vxpose.xlu0.c.b16.cont [2/8] %v840, 128
        %849 = vxpose.xlu0.c.b16.cont [3/8] %v841, 128
        %850 = vxpose.xlu0.c.b16.cont [4/8] %v842, 128
        %851 = vxpose.xlu0.c.b16.cont [5/8] 0, 128
        %852 = vxpose.xlu0.c.b16.cont [6/8] 0, 128
        %853 = vxpose.xlu0.c.b16.cont [7/8] 0, 128
        %854 = vxpose.xlu0.c.b16.end [8/8] 0, 128
        %v855 = vpop.trf.xlu0
        %v856 = vpop.trf.xlu0
        %v857 = vpop.trf.xlu0
        %v858 = vpop.trf.xlu0
        %v859 = vpop.trf.xlu0
        %v860 = vpop.trf.xlu0
        %v861 = vpop.trf.xlu0
        %v862 = vpop.trf.xlu0
        %vm863 = vcmask 523264
        %v865 = vsel %vm863, %v855, 0
        %v868 = vsel %vm863, %v856, 0
        %v871 = vsel %vm863, %v857, 0
        %v874 = vsel %vm863, %v858, 0
        %v877 = vsel %vm863, %v859, 0
        %v880 = vsel %vm863, %v860, 0
        %v883 = vsel %vm863, %v861, 0
        %v886 = vsel %vm863, %v862, 0
        %888 = vmatprep.subr.bf16.mxu0 0
        %889 = vmatpush1.bf16.msra.mxu0 0
        %890 = vmatprep.subr.bf16.mxu0 0
        %891 = vmatpush1.bf16.msra.mxu0 0
        %892 = vmatprep.subr.bf16.mxu0 0
        %893 = vmatpush1.bf16.msra.mxu0 0
        %894 = vmatprep.subr.bf16.mxu0 0
        %895 = vmatpush1.bf16.msra.mxu0 0
        %896 = vmatprep.subr.bf16.mxu0 0
        %897 = vmatpush1.bf16.msra.mxu0 %v846
        %898 = vmatprep.subr.bf16.mxu0 0
        %899 = vmatpush1.bf16.msra.mxu0 %v845
        %900 = vmatprep.subr.bf16.mxu0 0
        %901 = vmatpush1.bf16.msra.mxu0 %v844
        %902 = vmatprep.subr.bf16.mxu0 0
        %903 = vmatpush1.bf16.msra.mxu0 %v843
        %904 = vmatprep.subr.bf16.mxu0 0
        %905 = vmatpush2.bf16.msra.mxu0 0
        %906 = vmatprep.subr.bf16.mxu0 0
        %907 = vmatpush2.bf16.msra.mxu0 0
        %908 = vmatprep.subr.bf16.mxu0 0
        %909 = vmatpush2.bf16.msra.mxu0 0
        %910 = vmatprep.subr.bf16.mxu0 0
        %911 = vmatpush2.bf16.msra.mxu0 0
        %912 = vmatprep.subr.bf16.mxu0 0
        %913 = vmatpush2.bf16.msra.mxu0 0
        %914 = vmatprep.subr.bf16.mxu0 0
        %915 = vmatpush2.bf16.msra.mxu0 0
        %916 = vmatprep.subr.bf16.mxu0 0
        %917 = vmatpush2.bf16.msra.mxu0 0
        %918 = vmatprep.subr.bf16.mxu0 0
        %919 = vmatpush2.bf16.msra.mxu0 0
        %920 = vmatprep.mubr.bf16.mxu0 0
        %921 = vmatmul.mubr.bf16.gmra.mxu0 %v865
        %v922 = vpop.f32.mrf.mxu0
        %v923 = vadd.f32 0.0, %v922
        %v924 = vpop.f32.mrf.mxu0
        %v925 = vpop.f32.mrf.mxu0
        %v926 = vadd.f32 0.0, %v925
        %v927 = vpop.f32.mrf.mxu0
        %928 = vmatprep.mubr.bf16.mxu0 0
        %929 = vmatmul.mubr.bf16.gmra.mxu0 %v868
        %v930 = vpop.f32.mrf.mxu0
        %v931 = vadd.f32 0.0, %v930
        %v932 = vpop.f32.mrf.mxu0
        %v933 = vpop.f32.mrf.mxu0
        %v934 = vadd.f32 0.0, %v933
        %v935 = vpop.f32.mrf.mxu0
        %936 = vmatprep.mubr.bf16.mxu0 0
        %937 = vmatmul.mubr.bf16.gmra.mxu0 %v871
        %v938 = vpop.f32.mrf.mxu0
        %v939 = vadd.f32 0.0, %v938
        %v940 = vpop.f32.mrf.mxu0
        %v941 = vpop.f32.mrf.mxu0
        %v942 = vadd.f32 0.0, %v941
        %v943 = vpop.f32.mrf.mxu0
        %944 = vmatprep.mubr.bf16.mxu0 0
        %945 = vmatmul.mubr.bf16.gmra.mxu0 %v874
        %v946 = vpop.f32.mrf.mxu0
        %v947 = vadd.f32 0.0, %v946
        %v948 = vpop.f32.mrf.mxu0
        %v949 = vpop.f32.mrf.mxu0
        %v950 = vadd.f32 0.0, %v949
        %v951 = vpop.f32.mrf.mxu0
        %952 = vmatprep.mubr.bf16.mxu0 0
        %953 = vmatmul.mubr.bf16.gmra.mxu0 %v877
        %v954 = vpop.f32.mrf.mxu0
        %v955 = vadd.f32 0.0, %v954
        %v956 = vpop.f32.mrf.mxu0
        %v957 = vpop.f32.mrf.mxu0
        %v958 = vadd.f32 0.0, %v957
        %v959 = vpop.f32.mrf.mxu0
        %960 = vmatprep.mubr.bf16.mxu0 0
        %961 = vmatmul.mubr.bf16.gmra.mxu0 %v880
        %v962 = vpop.f32.mrf.mxu0
        %v963 = vadd.f32 0.0, %v962
        %v964 = vpop.f32.mrf.mxu0
        %v965 = vpop.f32.mrf.mxu0
        %v966 = vadd.f32 0.0, %v965
        %v967 = vpop.f32.mrf.mxu0
        %968 = vmatprep.mubr.bf16.mxu0 0
        %969 = vmatmul.mubr.bf16.gmra.mxu0 %v883
        %v970 = vpop.f32.mrf.mxu0
        %v971 = vadd.f32 0.0, %v970
        %v972 = vpop.f32.mrf.mxu0
        %v973 = vpop.f32.mrf.mxu0
        %v974 = vadd.f32 0.0, %v973
        %v975 = vpop.f32.mrf.mxu0
        %976 = vmatprep.mubr.bf16.mxu0 0
        %977 = vmatmul.mubr.bf16.gmra.mxu0 %v886
        %v978 = vpop.f32.mrf.mxu0
        %v979 = vadd.f32 0.0, %v978
        %v980 = vpop.f32.mrf.mxu0
        %v981 = vpop.f32.mrf.mxu0
        %v982 = vadd.f32 0.0, %v981
        %v983 = vpop.f32.mrf.mxu0
        %984 = vdwg.mxu0
        %v985 = vadd.f32 %v823, %v923
        %v986 = vadd.f32 %v824, %v926
        %v987 = vadd.f32 %v825, %v931
        %v988 = vadd.f32 %v826, %v934
        %v989 = vadd.f32 %v827, %v939
        %v990 = vadd.f32 %v828, %v942
        %v991 = vadd.f32 %v829, %v947
        %v992 = vadd.f32 %v830, %v950
        %v993 = vadd.f32 %v831, %v955
        %v994 = vadd.f32 %v832, %v958
        %v995 = vadd.f32 %v833, %v963
        %v996 = vadd.f32 %v834, %v966
        %v997 = vadd.f32 %v835, %v971
        %v998 = vadd.f32 %v836, %v974
        %v999 = vadd.f32 %v837, %v979
        %v1000 = vadd.f32 %v838, %v982
        %1001 = vst [vmem:[#allocation2] sm:$0xff] %v985
        %1002 = vst [vmem:[#allocation2 + $0x8] sm:$0xff] %v986
        %1003 = vst [vmem:[#allocation2 + $0x10] sm:$0xff] %v987
        %1004 = vst [vmem:[#allocation2 + $0x18] sm:$0xff] %v988
        %1005 = vst [vmem:[#allocation2 + $0x20] sm:$0xff] %v989
        %1006 = vst [vmem:[#allocation2 + $0x28] sm:$0xff] %v990
        %1007 = vst [vmem:[#allocation2 + $0x30] sm:$0xff] %v991
        %1008 = vst [vmem:[#allocation2 + $0x38] sm:$0xff] %v992
        %1009 = vst [vmem:[#allocation2 + $0x40] sm:$0xff] %v993
        %1010 = vst [vmem:[#allocation2 + $0x48] sm:$0xff] %v994
        %1011 = vst [vmem:[#allocation2 + $0x50] sm:$0xff] %v995
        %1012 = vst [vmem:[#allocation2 + $0x58] sm:$0xff] %v996
        %1013 = vst [vmem:[#allocation2 + $0x60] sm:$0xff] %v997
        %1014 = vst [vmem:[#allocation2 + $0x68] sm:$0xff] %v998
        %1015 = vst [vmem:[#allocation2 + $0x70] sm:$0xff] %v999
        %1016 = vst [vmem:[#allocation2 + $0x78] sm:$0xff] %v1000
        // Predicated region
        $region77: #{tpu_custom_call.1} parent=51 // pred_check
          %p1017 = pneg %p467
        $region78: #{tpu_custom_call.1} parent=51 // pred_check_branch
          %1019 = sbr.rel (%p1017) target = $region80
        $region79: #{tpu_custom_call.1} parent=51 // pred_region
          %v1020 = vld [vmem:[#allocation2] sm:$0xff]
          %v1021 = vld [vmem:[#allocation2 + $0x8] sm:$0xff]
          %v1022 = vld [vmem:[#allocation2 + $0x10] sm:$0xff]
          %v1023 = vld [vmem:[#allocation2 + $0x18] sm:$0xff]
          %v1024 = vld [vmem:[#allocation2 + $0x20] sm:$0xff]
          %v1025 = vld [vmem:[#allocation2 + $0x28] sm:$0xff]
          %v1026 = vld [vmem:[#allocation2 + $0x30] sm:$0xff]
          %v1027 = vld [vmem:[#allocation2 + $0x38] sm:$0xff]
          %v1028 = vld [vmem:[#allocation2 + $0x40] sm:$0xff]
          %v1029 = vld [vmem:[#allocation2 + $0x48] sm:$0xff]
          %v1030 = vld [vmem:[#allocation2 + $0x50] sm:$0xff]
          %v1031 = vld [vmem:[#allocation2 + $0x58] sm:$0xff]
          %v1032 = vld [vmem:[#allocation2 + $0x60] sm:$0xff]
          %v1033 = vld [vmem:[#allocation2 + $0x68] sm:$0xff]
          %v1034 = vld [vmem:[#allocation2 + $0x70] sm:$0xff]
          %v1035 = vld [vmem:[#allocation2 + $0x78] sm:$0xff]
          %v1036 = vmul.f32 %v1020, 0.015625
          %v1037 = vmul.f32 %v1021, 0.015625
          %v1038 = vmul.f32 %v1022, 0.015625
          %v1039 = vmul.f32 %v1023, 0.015625
          %v1040 = vmul.f32 %v1024, 0.015625
          %v1041 = vmul.f32 %v1025, 0.015625
          %v1042 = vmul.f32 %v1026, 0.015625
          %v1043 = vmul.f32 %v1027, 0.015625
          %v1044 = vmul.f32 %v1028, 0.015625
          %v1045 = vmul.f32 %v1029, 0.015625
          %v1046 = vmul.f32 %v1030, 0.015625
          %v1047 = vmul.f32 %v1031, 0.015625
          %v1048 = vmul.f32 %v1032, 0.015625
          %v1049 = vmul.f32 %v1033, 0.015625
          %v1050 = vmul.f32 %v1034, 0.015625
          %v1051 = vmul.f32 %v1035, 0.015625
          %v1052 = vpack.c.bf16 %v1037, %v1036
          %v1053 = vpack.c.bf16 %v1039, %v1038
          %v1054 = vpack.c.bf16 %v1041, %v1040
          %v1055 = vpack.c.bf16 %v1043, %v1042
          %v1056 = vpack.c.bf16 %v1045, %v1044
          %v1057 = vpack.c.bf16 %v1047, %v1046
          %v1058 = vpack.c.bf16 %v1049, %v1048
          %v1059 = vpack.c.bf16 %v1051, %v1050
          %v1060 = vld [vmem:[#allocation11] sm:$0xf]
          %v1061 = vld [vmem:[#allocation11 + $0x4] sm:$0xf]
          %v1062 = vld [vmem:[#allocation11 + $0x8] sm:$0xf]
          %v1063 = vld [vmem:[#allocation11 + $0xc] sm:$0xf]
          %v1064 = vld [vmem:[#allocation11 + $0x10] sm:$0xf]
          %v1065 = vld [vmem:[#allocation11 + $0x14] sm:$0xf]
          %v1066 = vld [vmem:[#allocation11 + $0x18] sm:$0xf]
          %v1067 = vld [vmem:[#allocation11 + $0x1c] sm:$0xf]
          %v1068 = vld [vmem:[#allocation11 + $0x20] sm:$0xf]
          %v1069 = vld [vmem:[#allocation11 + $0x24] sm:$0xf]
          %v1070 = vld [vmem:[#allocation11 + $0x28] sm:$0xf]
          %v1071 = vld [vmem:[#allocation11 + $0x2c] sm:$0xf]
          %v1072 = vld [vmem:[#allocation11 + $0x30] sm:$0xf]
          %v1073 = vld [vmem:[#allocation11 + $0x34] sm:$0xf]
          %v1074 = vld [vmem:[#allocation11 + $0x38] sm:$0xf]
          %v1075 = vld [vmem:[#allocation11 + $0x3c] sm:$0xf]
          %v1092 = vunpack.c.l.b16 %v1060
          %v1093 = vunpack.c.l.b16 %v1061
          %v1094 = vunpack.c.l.b16 %v1062
          %v1095 = vunpack.c.l.b16 %v1063
          %v1096 = vunpack.c.l.b16 %v1064
          %v1097 = vunpack.c.l.b16 %v1065
          %v1098 = vunpack.c.l.b16 %v1066
          %v1099 = vunpack.c.l.b16 %v1067
          %v1100 = vunpack.c.l.b16 %v1068
          %v1101 = vunpack.c.l.b16 %v1069
          %v1102 = vunpack.c.l.b16 %v1070
          %v1103 = vunpack.c.l.b16 %v1071
          %v1104 = vunpack.c.l.b16 %v1072
          %v1105 = vunpack.c.l.b16 %v1073
          %v1106 = vunpack.c.l.b16 %v1074
          %v1107 = vunpack.c.l.b16 %v1075
          %v1108 = vpack.c.b16 %v1093, %v1092
          %v1109 = vpack.c.b16 %v1095, %v1094
          %v1110 = vpack.c.b16 %v1097, %v1096
          %v1111 = vpack.c.b16 %v1099, %v1098
          %v1112 = vpack.c.b16 %v1101, %v1100
          %v1113 = vpack.c.b16 %v1103, %v1102
          %v1114 = vpack.c.b16 %v1105, %v1104
          %v1115 = vpack.c.b16 %v1107, %v1106
          %1124 = vmatprep.subr.bf16.mxu0 0
          %1125 = vmatpush1.bf16.msra.mxu0 %v1059
          %1126 = vmatprep.subr.bf16.mxu0 0
          %1127 = vmatpush1.bf16.msra.mxu0 %v1058
          %1128 = vmatprep.subr.bf16.mxu0 0
          %1129 = vmatpush1.bf16.msra.mxu0 %v1057
          %1130 = vmatprep.subr.bf16.mxu0 0
          %1131 = vmatpush1.bf16.msra.mxu0 %v1056
          %1132 = vmatprep.subr.bf16.mxu0 0
          %1133 = vmatpush1.bf16.msra.mxu0 %v1055
          %1134 = vmatprep.subr.bf16.mxu0 0
          %1135 = vmatpush1.bf16.msra.mxu0 %v1054
          %1136 = vmatprep.subr.bf16.mxu0 0
          %1137 = vmatpush1.bf16.msra.mxu0 %v1053
          %1138 = vmatprep.subr.bf16.mxu0 0
          %1139 = vmatpush1.bf16.msra.mxu0 %v1052
          %1140 = vmatprep.subr.bf16.mxu0 0
          %1141 = vmatpush2.bf16.msra.mxu0 0
          %1142 = vmatprep.subr.bf16.mxu0 0
          %1143 = vmatpush2.bf16.msra.mxu0 0
          %1144 = vmatprep.subr.bf16.mxu0 0
          %1145 = vmatpush2.bf16.msra.mxu0 0
          %1146 = vmatprep.subr.bf16.mxu0 0
          %1147 = vmatpush2.bf16.msra.mxu0 0
          %1148 = vmatprep.subr.bf16.mxu0 0
          %1149 = vmatpush2.bf16.msra.mxu0 0
          %1150 = vmatprep.subr.bf16.mxu0 0
          %1151 = vmatpush2.bf16.msra.mxu0 0
          %1152 = vmatprep.subr.bf16.mxu0 0
          %1153 = vmatpush2.bf16.msra.mxu0 0
          %1154 = vmatprep.subr.bf16.mxu0 0
          %1155 = vmatpush2.bf16.msra.mxu0 0
          %1156 = vmatprep.mubr.bf16.mxu0 0
          %1157 = vmatmul.mubr.bf16.gmra.mxu0 %v1108
          %v1158 = vpop.f32.mrf.mxu0
          %v1159 = vadd.f32 0.0, %v1158
          %v1160 = vpop.f32.mrf.mxu0
          %v1161 = vpop.f32.mrf.mxu0
          %v1162 = vadd.f32 0.0, %v1161
          %v1163 = vpop.f32.mrf.mxu0
          %1164 = vmatprep.mubr.bf16.mxu0 0
          %1165 = vmatmul.mubr.bf16.gmra.mxu0 %v1109
          %v1166 = vpop.f32.mrf.mxu0
          %v1167 = vadd.f32 0.0, %v1166
          %v1168 = vpop.f32.mrf.mxu0
          %v1169 = vpop.f32.mrf.mxu0
          %v1170 = vadd.f32 0.0, %v1169
          %v1171 = vpop.f32.mrf.mxu0
          %1172 = vmatprep.mubr.bf16.mxu0 0
          %1173 = vmatmul.mubr.bf16.gmra.mxu0 %v1110
          %v1174 = vpop.f32.mrf.mxu0
          %v1175 = vadd.f32 0.0, %v1174
          %v1176 = vpop.f32.mrf.mxu0
          %v1177 = vpop.f32.mrf.mxu0
          %v1178 = vadd.f32 0.0, %v1177
          %v1179 = vpop.f32.mrf.mxu0
          %1180 = vmatprep.mubr.bf16.mxu0 0
          %1181 = vmatmul.mubr.bf16.gmra.mxu0 %v1111
          %v1182 = vpop.f32.mrf.mxu0
          %v1183 = vadd.f32 0.0, %v1182
          %v1184 = vpop.f32.mrf.mxu0
          %v1185 = vpop.f32.mrf.mxu0
          %v1186 = vadd.f32 0.0, %v1185
          %v1187 = vpop.f32.mrf.mxu0
          %1188 = vmatprep.mubr.bf16.mxu0 0
          %1189 = vmatmul.mubr.bf16.gmra.mxu0 %v1112
          %v1190 = vpop.f32.mrf.mxu0
          %v1191 = vadd.f32 0.0, %v1190
          %v1192 = vpop.f32.mrf.mxu0
          %v1193 = vpop.f32.mrf.mxu0
          %v1194 = vadd.f32 0.0, %v1193
          %v1195 = vpop.f32.mrf.mxu0
          %1196 = vmatprep.mubr.bf16.mxu0 0
          %1197 = vmatmul.mubr.bf16.gmra.mxu0 %v1113
          %v1198 = vpop.f32.mrf.mxu0
          %v1199 = vadd.f32 0.0, %v1198
          %v1200 = vpop.f32.mrf.mxu0
          %v1201 = vpop.f32.mrf.mxu0
          %v1202 = vadd.f32 0.0, %v1201
          %v1203 = vpop.f32.mrf.mxu0
          %1204 = vmatprep.mubr.bf16.mxu0 0
          %1205 = vmatmul.mubr.bf16.gmra.mxu0 %v1114
          %v1206 = vpop.f32.mrf.mxu0
          %v1207 = vadd.f32 0.0, %v1206
          %v1208 = vpop.f32.mrf.mxu0
          %v1209 = vpop.f32.mrf.mxu0
          %v1210 = vadd.f32 0.0, %v1209
          %v1211 = vpop.f32.mrf.mxu0
          %1212 = vmatprep.mubr.bf16.mxu0 0
          %1213 = vmatmul.mubr.bf16.gmra.mxu0 %v1115
          %v1214 = vpop.f32.mrf.mxu0
          %v1215 = vadd.f32 0.0, %v1214
          %v1216 = vpop.f32.mrf.mxu0
          %v1217 = vpop.f32.mrf.mxu0
          %v1218 = vadd.f32 0.0, %v1217
          %v1219 = vpop.f32.mrf.mxu0
          %1220 = vdwg.mxu0
          %v1221 = vpack.c.bf16 %v1162, %v1159
          %v1222 = vpack.c.bf16 %v1170, %v1167
          %v1223 = vpack.c.bf16 %v1178, %v1175
          %v1224 = vpack.c.bf16 %v1186, %v1183
          %v1225 = vpack.c.bf16 %v1194, %v1191
          %v1226 = vpack.c.bf16 %v1202, %v1199
          %v1227 = vpack.c.bf16 %v1210, %v1207
          %v1228 = vpack.c.bf16 %v1218, %v1215
          %v1237 = vunpack.c.l.b16 %v1221
          %v1238 = vunpack.c.h.b16 %v1221
          %v1239 = vunpack.c.l.b16 %v1222
          %v1240 = vunpack.c.h.b16 %v1222
          %v1241 = vunpack.c.l.b16 %v1223
          %v1242 = vunpack.c.h.b16 %v1223
          %v1243 = vunpack.c.l.b16 %v1224
          %v1244 = vunpack.c.h.b16 %v1224
          %v1245 = vunpack.c.l.b16 %v1225
          %v1246 = vunpack.c.h.b16 %v1225
          %v1247 = vunpack.c.l.b16 %v1226
          %v1248 = vunpack.c.h.b16 %v1226
          %v1249 = vunpack.c.l.b16 %v1227
          %v1250 = vunpack.c.h.b16 %v1227
          %v1251 = vunpack.c.l.b16 %v1228
          %v1252 = vunpack.c.h.b16 %v1228
          %v1253 = vpack.c.b16 %v1237, %v1237
          %v1254 = vpack.c.b16 %v1238, %v1238
          %v1255 = vpack.c.b16 %v1239, %v1239
          %v1256 = vpack.c.b16 %v1240, %v1240
          %v1257 = vpack.c.b16 %v1241, %v1241
          %v1258 = vpack.c.b16 %v1242, %v1242
          %v1259 = vpack.c.b16 %v1243, %v1243
          %v1260 = vpack.c.b16 %v1244, %v1244
          %v1261 = vpack.c.b16 %v1245, %v1245
          %v1262 = vpack.c.b16 %v1246, %v1246
          %v1263 = vpack.c.b16 %v1247, %v1247
          %v1264 = vpack.c.b16 %v1248, %v1248
          %v1265 = vpack.c.b16 %v1249, %v1249
          %v1266 = vpack.c.b16 %v1250, %v1250
          %v1267 = vpack.c.b16 %v1251, %v1251
          %v1268 = vpack.c.b16 %v1252, %v1252
          %1285 = vst [vmem:[%s457] sm:$0xf] %v1253
          %1286 = vst [vmem:[%s457 + $0x4] sm:$0xf] %v1254
          %1287 = vst [vmem:[%s457 + $0x8] sm:$0xf] %v1255
          %1288 = vst [vmem:[%s457 + $0xc] sm:$0xf] %v1256
          %1289 = vst [vmem:[%s457 + $0x10] sm:$0xf] %v1257
          %1290 = vst [vmem:[%s457 + $0x14] sm:$0xf] %v1258
          %1291 = vst [vmem:[%s457 + $0x18] sm:$0xf] %v1259
          %1292 = vst [vmem:[%s457 + $0x1c] sm:$0xf] %v1260
          %1293 = vst [vmem:[%s457 + $0x20] sm:$0xf] %v1261
          %1294 = vst [vmem:[%s457 + $0x24] sm:$0xf] %v1262
          %1295 = vst [vmem:[%s457 + $0x28] sm:$0xf] %v1263
          %1296 = vst [vmem:[%s457 + $0x2c] sm:$0xf] %v1264
          %1297 = vst [vmem:[%s457 + $0x30] sm:$0xf] %v1265
          %1298 = vst [vmem:[%s457 + $0x34] sm:$0xf] %v1266
          %1299 = vst [vmem:[%s457 + $0x38] sm:$0xf] %v1267
          %1300 = vst [vmem:[%s457 + $0x3c] sm:$0xf] %v1268
          %v1301 = vld [vmem:[%s7] sm:$0x1]
          %v1302 = vpack.c.bf16 %v1301, %v1301
          %1303 = vmatprep.subr.bf16.mxu0 0
          %1304 = vmatpush1.bf16.msra.mxu0 %v1059
          %1305 = vmatprep.subr.bf16.mxu0 0
          %1306 = vmatpush1.bf16.msra.mxu0 %v1058
          %1307 = vmatprep.subr.bf16.mxu0 0
          %1308 = vmatpush1.bf16.msra.mxu0 %v1057
          %1309 = vmatprep.subr.bf16.mxu0 0
          %1310 = vmatpush1.bf16.msra.mxu0 %v1056
          %1311 = vmatprep.subr.bf16.mxu0 0
          %1312 = vmatpush1.bf16.msra.mxu0 %v1055
          %1313 = vmatprep.subr.bf16.mxu0 0
          %1314 = vmatpush1.bf16.msra.mxu0 %v1054
          %1315 = vmatprep.subr.bf16.mxu0 0
          %1316 = vmatpush1.bf16.msra.mxu0 %v1053
          %1317 = vmatprep.subr.bf16.mxu0 0
          %1318 = vmatpush1.bf16.msra.mxu0 %v1052
          %1319 = vmatprep.subr.bf16.mxu0 0
          %1320 = vmatpush2.bf16.msra.mxu0 0
          %1321 = vmatprep.subr.bf16.mxu0 0
          %1322 = vmatpush2.bf16.msra.mxu0 0
          %1323 = vmatprep.subr.bf16.mxu0 0
          %1324 = vmatpush2.bf16.msra.mxu0 0
          %1325 = vmatprep.subr.bf16.mxu0 0
          %1326 = vmatpush2.bf16.msra.mxu0 0
          %1327 = vmatprep.subr.bf16.mxu0 0
          %1328 = vmatpush2.bf16.msra.mxu0 0
          %1329 = vmatprep.subr.bf16.mxu0 0
          %1330 = vmatpush2.bf16.msra.mxu0 0
          %1331 = vmatprep.subr.bf16.mxu0 0
          %1332 = vmatpush2.bf16.msra.mxu0 0
          %1333 = vmatprep.subr.bf16.mxu0 0
          %1334 = vmatpush2.bf16.msra.mxu0 0
          %1335 = vmatprep.mubr.bf16.mxu0 0
          %1336 = vmatmul.mubr.bf16.gmra.mxu0 %v1302
          %v1337 = vpop.f32.mrf.mxu0
          %v1338 = vadd.f32 0.0, %v1337
          %v1339 = vpop.f32.mrf.mxu0
          %v1340 = vpop.f32.mrf.mxu0
          %v1341 = vpop.f32.mrf.mxu0
          %1342 = vdwg.mxu0
          %1343 = vst [vmem:[%s463] sm:$0x1] %v1338
        $region80: #{tpu_custom_call.1} parent=51 // pred_fallthru
          _
        %s1344 = sand.u32 %s236, 1
        %s1345 = scalar_lea.sflag [#allocation5], %s1344
        %s1346 = sand.u32 %s236, 1
        %s1347 = smul.addr %s1346, 64
        %s1348 = scalar_lea.vmem [#allocation12], %s1347
        %s1349 = sand.u32 %s262, 1
        %s1350 = scalar_lea.sflag [#allocation14], %s1349
        %s1351 = sand.u32 %s262, 1
        %s1352 = scalar_lea.vmem [#allocation13], %s1351
        // Predicated region
        $region81: #{tpu_custom_call.1} parent=51 // pred_check
          %p1353 = pneg %p246
        $region82: #{tpu_custom_call.1} parent=51 // pred_check_branch
          %1355 = sbr.rel (%p1353) target = $region84
        $region83: #{tpu_custom_call.1} parent=51 // pred_region
          %s1357 = ssub.s32 1024, 1024
          %1358 = vsyncadd %s1345, %s1357
          %s1359 = smul.addr %s38, 16
          %s1360 = smul.addr %s1359, 64
          %s1361 = scalar_lea.hbm %s8, %s1360
          %s1362 = sshll.u32 %s1348, 4
          %s1363 = int_to_ptr.vmem [resolvable:$true] %s1362
          %1368 = dma.vmem_to_hbm [thread:$0]  %s1363, 1024, %s1361, %s1345, 64, 64, 4
        $region84: #{tpu_custom_call.1} parent=51 // pred_fallthru
          _
        // Predicated region
        $region85: #{tpu_custom_call.1} parent=51 // pred_check
          %p1369 = pneg %p272
        $region86: #{tpu_custom_call.1} parent=51 // pred_check_branch
          %1371 = sbr.rel (%p1369) target = $region88
        $region87: #{tpu_custom_call.1} parent=51 // pred_region
          %s1373 = ssub.s32 16, 16
          %1374 = vsyncadd %s1350, %s1373
          %s1375 = smul.addr %s38, 16
          %s1376 = scalar_lea.hbm %s9, %s1375
          %s1378 = sshll.u32 %s1352, 4
          %s1379 = int_to_ptr.vmem [resolvable:$true] %s1378
          %1381 = dma.vmem_to_hbm [thread:$0]  %s1379, 16, %s1376, %s1350
        $region88: #{tpu_custom_call.1} parent=51 // pred_fallthru
          _
      $region52: #{tpu_custom_call.1} parent=5 // pred_fallthru
        _
      %p1382 = scmp.le.s32.totalorder 2, %s29
      // Predicated region
      $region89: #{tpu_custom_call.1} parent=5 // pred_check
        %p1383 = pneg %p1382
      $region90: #{tpu_custom_call.1} parent=5 // pred_check_branch
        %1385 = sbr.rel (%p1383) target = $region92
      $region91: #{tpu_custom_call.1} parent=5 // pred_region
        %s1386 = ssub.s32 %s29, 2
        // Predicated region
        $region93: #{tpu_custom_call.1} parent=91 // pred_check
          %p1387 = pneg %p252
        $region94: #{tpu_custom_call.1} parent=91 // pred_check_branch
          %1389 = sbr.rel (%p1387) target = $region96
        $region95: #{tpu_custom_call.1} parent=91 // pred_region
          %s1390 = sand.u32 %s237, 1
          %s1391 = scalar_lea.sflag [#allocation5], %s1390
          %s1392 = sand.u32 %s237, 1
          %s1393 = smul.addr %s1392, 64
          %s1394 = scalar_lea.vmem [#allocation12], %s1393
          %1395 = dma.done %s1391, 1024
        $region96: #{tpu_custom_call.1} parent=91 // pred_fallthru
          _
        // Predicated region
        $region97: #{tpu_custom_call.1} parent=91 // pred_check
          %p1396 = pneg %p278
        $region98: #{tpu_custom_call.1} parent=91 // pred_check_branch
          %1398 = sbr.rel (%p1396) target = $region100
        $region99: #{tpu_custom_call.1} parent=91 // pred_region
          %s1399 = sand.u32 %s263, 1
          %s1400 = scalar_lea.sflag [#allocation14], %s1399
          %s1401 = sand.u32 %s263, 1
          %s1402 = scalar_lea.vmem [#allocation13], %s1401
          %1403 = dma.done %s1400, 16
        $region100: #{tpu_custom_call.1} parent=91 // pred_fallthru
          _
      $region92: #{tpu_custom_call.1} parent=5 // pred_fallthru
        _
    $region6: #{tpu_custom_call.1} parent=1 // loop_footer
      %s33 = sadd.s32 1, %s29
    $region7: #{tpu_custom_call.1} parent=1 // loop_footer_branch
      %28 = sbr.rel target = $region3
    $region8: #{tpu_custom_call.1} parent=1 // loop_exit
      _
    %1404 = vsyncpa [#allocation4], 1
    %s1405 = scalar_lea.sflag [#allocation4], 1
    %1406 = vsyncpa %s1405, 1
    %1407 = vsyncpa [#allocation7], 1
    %s1408 = scalar_lea.sflag [#allocation7], 1
    %1409 = vsyncpa %s1408, 1
    %1410 = vsyncpa [#allocation10], 1
    %1411 = vsyncpa [#allocation5], 1
    %s1412 = scalar_lea.sflag [#allocation5], 1
    %1413 = vsyncpa %s1412, 1
    %1414 = vsyncpa [#allocation14], 1
    %s1415 = scalar_lea.sflag [#allocation14], 1
    %1416 = vsyncpa %s1415, 1

</llo_original>
